<compile_context>
chip_gen: v7x
topology: tpu7x:2x2x1
jax: 0.10.0
libtpu: 0.0.40
codegen_flags: <defaults>
</compile_context>

<pallas_src>
import functools
import numpy as np
import jax
import jax.numpy as jnp
from jax.experimental import pallas as pl
from jax.experimental.pallas import tpu as pltpu


# ----------------------------- model config -----------------------------
INPUT_SIZE = 16      # I
HIDDEN_SIZE = 32     # H
NUM_LAYERS = 2       # L
NUM_MIXTURES = 4     # K
OUTPUT_SIZE = 16     # O
BATCH = 2            # B
SEQ_LEN = 8          # T

MDN_DIM = NUM_MIXTURES * (1 + 2 * OUTPUT_SIZE)   # K*(1+2O) = 132


# ----------------------------- Pallas kernel -----------------------------
def _lstm_act(gates, c_prev, H):
    """Gate columns ordered (i, f, o, g): one contiguous sigmoid slice + one tanh."""
    sig = jax.nn.sigmoid(gates[:, : 3 * H])
    g_g = jnp.tanh(gates[:, 3 * H:])
    i_g = sig[:, :H]
    f_g = sig[:, H: 2 * H]
    o_g = sig[:, 2 * H: 3 * H]
    c_new = f_g * c_prev + i_g * g_g
    h_new = o_g * jnp.tanh(c_new)
    return h_new, c_new


def mdnrnn_kernel(x_ref,        # (T*B, I)       time-major input rows
                  wih0_ref,     # (I, 4H)        layer-0 input weights (transposed, gates i,f,o,g)
                  whh0_ref,     # (H, 4H)        layer-0 recurrent weights
                  b0_ref,       # (1, 4H)        layer-0 combined bias (b_ih + b_hh)
                  wcat_ref,     # (L-1, 2H, 4H)  layers>=1 fused [W_ih; W_hh]
                  bcat_ref,     # (L-1, 1, 4H)   layers>=1 combined biases
                  wmdn_ref,     # (H, MDN_DIM)   MDN linear weights (transposed)
                  bmdn_ref,     # (1, MDN_DIM)   MDN linear bias
                  mdn_ref,      # out: (T*B, MDN_DIM) lane-dense MDN pre-activations
                  hn_ref,       # out: (L, B, H)
                  cn_ref,       # out: (L, B, H)
                  *, seq_len, batch, num_layers, hidden_size):
    T, B, L, H = seq_len, batch, num_layers, hidden_size
    f32 = jnp.float32

    # (1) Layer-0 input projection (+ combined bias) for all timesteps: one MXU push.
    xproj = jnp.dot(x_ref[...], wih0_ref[...], preferred_element_type=f32) + b0_ref[...]

    whh0 = whh0_ref[...]
    wcat = [wcat_ref[l] for l in range(L - 1)]     # each (2H, 4H)
    bcat = [bcat_ref[l] for l in range(L - 1)]     # each (1, 4H)

    # hidden=None in the PyTorch module -> zero initial state.
    h = [jnp.zeros((B, H), f32) for _ in range(L)]
    c = [jnp.zeros((B, H), f32) for _ in range(L)]

    # (2) Fully unrolled time recurrence (T is small & static): no grid steps,
    #     no per-step DMA, one matmul per layer per step.
    outs = []
    for t in range(T):
        # layer 0: input projection already done; only the recurrent matmul remains.
        g0 = xproj[t * B:(t + 1) * B, :] + jnp.dot(h[0], whh0,
                                                   preferred_element_type=f32)
        h[0], c[0] = _lstm_act(g0, c[0], H)
        inp = h[0]
        # layers >= 1: single fused matmul on concat([inp, h_prev]).
        for layer in range(1, L):
            cat = jnp.concatenate([inp, h[layer]], axis=-1)          # (B, 2H)
            g = (jnp.dot(cat, wcat[layer - 1], preferred_element_type=f32)
                 + bcat[layer - 1])
            h[layer], c[layer] = _lstm_act(g, c[layer], H)
            inp = h[layer]
        outs.append(inp)

    # (3) Deferred MDN head: one matmul over all timesteps, one lane-dense store.
    hout = jnp.concatenate(outs, axis=0)                             # (T*B, H)
    mdn_ref[...] = (jnp.dot(hout, wmdn_ref[...], preferred_element_type=f32)
                    + bmdn_ref[...])

    for layer in range(L):
        hn_ref[layer] = h[layer]
        cn_ref[layer] = c[layer]


# ----------------------------- weight packing -----------------------------
def _reorder_gates(w, H):
    """PyTorch gate order (i, f, g, o) -> kernel order (i, f, o, g) along axis 0 (4H)."""
    return jnp.concatenate([w[: 2 * H], w[3 * H:], w[2 * H: 3 * H]], axis=0)


def _pack_params(params):
    """PyTorch-layout params -> transposed / gate-reordered / fused kernel slabs."""
    H, L = HIDDEN_SIZE, NUM_LAYERS
    wih0 = _reorder_gates(params["w_ih"][0], H).T                          # (I, 4H)
    whh0 = _reorder_gates(params["w_hh"][0], H).T                          # (H, 4H)
    b0 = _reorder_gates(params["b_ih"][0] + params["b_hh"][0], H)[None, :]  # (1, 4H)
    wcat = jnp.stack([
        jnp.concatenate([_reorder_gates(params["w_ih"][l], H).T,
                         _reorder_gates(params["w_hh"][l], H).T], axis=0)
        for l in range(1, L)])                                             # (L-1, 2H, 4H)
    bcat = jnp.stack([
        _reorder_gates(params["b_ih"][l] + params["b_hh"][l], H)[None, :]
        for l in range(1, L)])                                             # (L-1, 1, 4H)
    wmdn = params["w_mdn"].T                                               # (H, MDN_DIM)
    bmdn = params["b_mdn"][None, :]                                        # (1, MDN_DIM)
    # TODO(synk): optionally cast weights to bf16 (f32 accumulation) on v6e/v7x;
    # kept f32 here for strict numerical parity with the reference.
    return wih0, whh0, b0, wcat, bcat, wmdn, bmdn


# ----------------------------- wrapper -----------------------------
@jax.jit
def mdnrnn_forward(x, params):
    """x: [B, T, I] (PyTorch batch_first). Returns (pi, mu, sigma, (h_n, c_n))."""
    B, T, I = x.shape
    H, L, K, O = HIDDEN_SIZE, NUM_LAYERS, NUM_MIXTURES, OUTPUT_SIZE

    wih0, whh0, b0, wcat, bcat, wmdn, bmdn = _pack_params(params)
    x2d = jnp.transpose(x, (1, 0, 2)).reshape(T * B, I)      # time-major rows

    kernel = functools.partial(
        mdnrnn_kernel, seq_len=T, batch=B, num_layers=L, hidden_size=H)

    def vmem():
        return pl.BlockSpec(memory_space=pltpu.MemorySpace.VMEM)

    mdn, h_n, c_n = pl.pallas_call(
        kernel,
        out_shape=(
            jax.ShapeDtypeStruct((T * B, MDN_DIM), jnp.float32),  # mdn slab (lane-dense)
            jax.ShapeDtypeStruct((L, B, H), jnp.float32),         # h_n
            jax.ShapeDtypeStruct((L, B, H), jnp.float32),         # c_n
        ),
        in_specs=[vmem() for _ in range(8)],
        out_specs=(vmem(), vmem(), vmem()),
    )(x2d, wih0, whh0, b0, wcat, bcat, wmdn, bmdn)

    # Split / activate the MDN outputs in the wrapper (cheap XLA ops).
    mdn_btf = jnp.transpose(mdn.reshape(T, B, MDN_DIM), (1, 0, 2))  # (B, T, MDN_DIM)
    pi = jax.nn.softmax(mdn_btf[..., :K], axis=-1)
    mu = mdn_btf[..., K:K + K * O].reshape(B, T, K, O)
    sigma = jnp.exp(mdn_btf[..., K + K * O:]).reshape(B, T, K, O)
    return pi, mu, sigma, (h_n, c_n)


# ----------------------------- pure-JAX reference -----------------------------
def mdnrnn_reference(x, params):
    """Straight transcription of the PyTorch forward (gate order i, f, g, o)."""
    B, T, I = x.shape
    H, L, K, O = HIDDEN_SIZE, NUM_LAYERS, NUM_MIXTURES, OUTPUT_SIZE
    h = [jnp.zeros((B, H), jnp.float32) for _ in range(L)]
    c = [jnp.zeros((B, H), jnp.float32) for _ in range(L)]
    outs = []
    for t in range(T):
        inp = x[:, t, :]
        for layer in range(L):
            gates = (inp @ params["w_ih"][layer].T
                     + h[layer] @ params["w_hh"][layer].T
                     + params["b_ih"][layer] + params["b_hh"][layer])
            i_g = jax.nn.sigmoid(gates[:, 0 * H:1 * H])
            f_g = jax.nn.sigmoid(gates[:, 1 * H:2 * H])
            g_g = jnp.tanh(gates[:, 2 * H:3 * H])
            o_g = jax.nn.sigmoid(gates[:, 3 * H:4 * H])
            c[layer] = f_g * c[layer] + i_g * g_g
            h[layer] = o_g * jnp.tanh(c[layer])
            inp = h[layer]
        outs.append(inp)
    rnn_out = jnp.stack(outs, axis=1)                        # (B, T, H)
    mdn = rnn_out @ params["w_mdn"].T + params["b_mdn"]      # (B, T, MDN_DIM)
    pi = jax.nn.softmax(mdn[..., :K], axis=-1)
    mu = mdn[..., K:K + K * O].reshape(B, T, K, O)
    sigma = jnp.exp(mdn[..., K + K * O:]).reshape(B, T, K, O)
    return pi, mu, sigma, (jnp.stack(h), jnp.stack(c))


# ----------------------------- param init -----------------------------
def init_params(key):
    """Deterministic synthetic weights in PyTorch layout (uniform(-1/sqrt(H), 1/sqrt(H)))."""
    H, I, L = HIDDEN_SIZE, INPUT_SIZE, NUM_LAYERS
    bound = 1.0 / np.sqrt(H)
    ks = jax.random.split(key, 4 * L + 2)
    u = lambda k, s: jax.random.uniform(k, s, jnp.float32, -bound, bound)
    w_ih, w_hh, b_ih, b_hh = [], [], [], []
    ki = 0
    for layer in range(L):
        in_dim = I if layer == 0 else H
        w_ih.append(u(ks[ki], (4 * H, in_dim))); ki += 1
        w_hh.append(u(ks[ki], (4 * H, H)));      ki += 1
        b_ih.append(u(ks[ki], (4 * H,)));        ki += 1
        b_hh.append(u(ks[ki], (4 * H,)));        ki += 1
    return {
        "w_ih": w_ih, "w_hh": w_hh, "b_ih": b_ih, "b_hh": b_hh,
        "w_mdn": u(ks[ki], (MDN_DIM, H)),
        "b_mdn": u(ks[ki + 1], (MDN_DIM,)),
    }


# ----------------------------- main -----------------------------
if __name__ == "__main__":
    key = jax.random.PRNGKey(0)
    k_x, k_p = jax.random.split(key)
    x = jax.random.normal(k_x, (BATCH, SEQ_LEN, INPUT_SIZE), jnp.float32)
    params = init_params(k_p)

    pi, mu, sigma, (h_n, c_n) = mdnrnn_forward(x, params)
    jax.block_until_ready((pi, mu, sigma, h_n, c_n))

    # correctness check against a pure-JAX reference
    pi_r, mu_r, sig_r, (h_r, c_r) = mdnrnn_reference(x, params)
    np.testing.assert_allclose(np.asarray(pi), np.asarray(pi_r), rtol=1e-4, atol=1e-5)
    np.testing.assert_allclose(np.asarray(mu), np.asarray(mu_r), rtol=1e-4, atol=1e-5)
    np.testing.assert_allclose(np.asarray(sigma), np.asarray(sig_r), rtol=1e-4, atol=1e-5)
    np.testing.assert_allclose(np.asarray(h_n), np.asarray(h_r), rtol=1e-4, atol=1e-5)
    np.testing.assert_allclose(np.asarray(c_n), np.asarray(c_r), rtol=1e-4, atol=1e-5)

    assert pi.shape == (BATCH, SEQ_LEN, NUM_MIXTURES)
    assert mu.shape == (BATCH, SEQ_LEN, NUM_MIXTURES, OUTPUT_SIZE)
    assert sigma.shape == (BATCH, SEQ_LEN, NUM_MIXTURES, OUTPUT_SIZE)
    print("KERNEL_OK")
</pallas_src>

<mosaic_0001>
module attributes {stable_mosaic.version = 11 : i64} {
  func.func @mdnrnn_kernel(%arg0: memref<16x16xf32, #tpu.memory_space<vmem>>, %arg1: memref<16x128xf32, #tpu.memory_space<vmem>>, %arg2: memref<32x128xf32, #tpu.memory_space<vmem>>, %arg3: memref<1x128xf32, #tpu.memory_space<vmem>>, %arg4: memref<1x64x128xf32, #tpu.memory_space<vmem>>, %arg5: memref<1x1x128xf32, #tpu.memory_space<vmem>>, %arg6: memref<32x132xf32, #tpu.memory_space<vmem>>, %arg7: memref<1x132xf32, #tpu.memory_space<vmem>>, %arg8: memref<16x132xf32, #tpu.memory_space<vmem>>, %arg9: memref<2x2x32xf32, #tpu.memory_space<vmem>>, %arg10: memref<2x2x32xf32, #tpu.memory_space<vmem>>) attributes {dimension_semantics = [], scalar_prefetch = 0 : i64, scratch_operands = 0 : i64, tpu.core_type = #tpu.core_type<tc>} {
    %c0 = arith.constant 0 : index
    %c0_0 = arith.constant 0 : index
    %0 = vector.load %arg0[%c0, %c0_0] : memref<16x16xf32, #tpu.memory_space<vmem>>, vector<16x16xf32>
    %c0_1 = arith.constant 0 : index
    %c0_2 = arith.constant 0 : index
    %1 = vector.load %arg1[%c0_1, %c0_2] : memref<16x128xf32, #tpu.memory_space<vmem>>, vector<16x128xf32>
    %cst = arith.constant dense<0.000000e+00> : vector<16x128xf32>
    %2 = tpu.matmul %0, %1, %cst {dimension_numbers = #tpu.dot_dimension_numbers<[1], [0], [0], [1], [0, 0, 1, 1], [], []>} : vector<16x16xf32>, vector<16x128xf32>, vector<16x128xf32> -> vector<16x128xf32>
    %c0_3 = arith.constant 0 : index
    %c0_4 = arith.constant 0 : index
    %3 = vector.load %arg3[%c0_3, %c0_4] : memref<1x128xf32, #tpu.memory_space<vmem>>, vector<1x128xf32>
    %4 = vector.broadcast %3 : vector<1x128xf32> to vector<16x128xf32>
    %5 = arith.addf %2, %4 : vector<16x128xf32>
    %c0_5 = arith.constant 0 : index
    %c0_6 = arith.constant 0 : index
    %6 = vector.load %arg2[%c0_5, %c0_6] : memref<32x128xf32, #tpu.memory_space<vmem>>, vector<32x128xf32>
    %c0_7 = arith.constant 0 : index
    %c0_8 = arith.constant 0 : index
    %c0_9 = arith.constant 0 : index
    %7 = vector.load %arg4[%c0_7, %c0_8, %c0_9] : memref<1x64x128xf32, #tpu.memory_space<vmem>>, vector<1x64x128xf32>
    %8 = vector.shape_cast %7 : vector<1x64x128xf32> to vector<64x128xf32>
    %c0_10 = arith.constant 0 : index
    %c0_11 = arith.constant 0 : index
    %c0_12 = arith.constant 0 : index
    %9 = vector.load %arg5[%c0_10, %c0_11, %c0_12] : memref<1x1x128xf32, #tpu.memory_space<vmem>>, vector<1x1x128xf32>
    %10 = vector.shape_cast %9 : vector<1x1x128xf32> to vector<1x128xf32>
    %cst_13 = arith.constant 0.000000e+00 : f32
    %11 = vector.broadcast %cst_13 : f32 to vector<2x32xf32>
    %cst_14 = arith.constant 0.000000e+00 : f32
    %12 = vector.broadcast %cst_14 : f32 to vector<2x32xf32>
    %cst_15 = arith.constant 0.000000e+00 : f32
    %13 = vector.broadcast %cst_15 : f32 to vector<2x32xf32>
    %cst_16 = arith.constant 0.000000e+00 : f32
    %14 = vector.broadcast %cst_16 : f32 to vector<2x32xf32>
    %15 = vector.extract_strided_slice %5 {offsets = [0, 0], sizes = [2, 128], strides = [1, 1]} : vector<16x128xf32> to vector<2x128xf32>
    %cst_17 = arith.constant dense<0.000000e+00> : vector<2x128xf32>
    %16 = tpu.matmul %11, %6, %cst_17 {dimension_numbers = #tpu.dot_dimension_numbers<[1], [0], [0], [1], [0, 0, 1, 1], [], []>} : vector<2x32xf32>, vector<32x128xf32>, vector<2x128xf32> -> vector<2x128xf32>
    %17 = arith.addf %15, %16 : vector<2x128xf32>
    %18 = vector.extract_strided_slice %17 {offsets = [0, 0], sizes = [2, 96], strides = [1, 1]} : vector<2x128xf32> to vector<2x96xf32>
    %19 = arith.negf %18 : vector<2x96xf32>
    %20 = math.exp %19 : vector<2x96xf32>
    %cst_18 = arith.constant 1.000000e+00 : f32
    %21 = vector.broadcast %cst_18 : f32 to vector<2x96xf32>
    %22 = arith.addf %21, %20 : vector<2x96xf32>
    %23 = arith.divf %21, %22 : vector<2x96xf32>
    %24 = vector.extract_strided_slice %17 {offsets = [0, 96], sizes = [2, 32], strides = [1, 1]} : vector<2x128xf32> to vector<2x32xf32>
    %25 = math.tanh %24 : vector<2x32xf32>
    %26 = vector.extract_strided_slice %23 {offsets = [0, 0], sizes = [2, 32], strides = [1, 1]} : vector<2x96xf32> to vector<2x32xf32>
    %27 = vector.extract_strided_slice %23 {offsets = [0, 32], sizes = [2, 32], strides = [1, 1]} : vector<2x96xf32> to vector<2x32xf32>
    %28 = vector.extract_strided_slice %23 {offsets = [0, 64], sizes = [2, 32], strides = [1, 1]} : vector<2x96xf32> to vector<2x32xf32>
    %29 = arith.mulf %27, %13 : vector<2x32xf32>
    %30 = arith.mulf %26, %25 : vector<2x32xf32>
    %31 = arith.addf %29, %30 : vector<2x32xf32>
    %32 = math.tanh %31 : vector<2x32xf32>
    %33 = arith.mulf %28, %32 : vector<2x32xf32>
    %34 = tpu.concatenate %33, %12 in 1 : vector<2x32xf32>, vector<2x32xf32> -> vector<2x64xf32>
    %cst_19 = arith.constant dense<0.000000e+00> : vector<2x128xf32>
    %35 = tpu.matmul %34, %8, %cst_19 {dimension_numbers = #tpu.dot_dimension_numbers<[1], [0], [0], [1], [0, 0, 1, 1], [], []>} : vector<2x64xf32>, vector<64x128xf32>, vector<2x128xf32> -> vector<2x128xf32>
    %36 = vector.broadcast %10 : vector<1x128xf32> to vector<2x128xf32>
    %37 = arith.addf %35, %36 : vector<2x128xf32>
    %38 = vector.extract_strided_slice %37 {offsets = [0, 0], sizes = [2, 96], strides = [1, 1]} : vector<2x128xf32> to vector<2x96xf32>
    %39 = arith.negf %38 : vector<2x96xf32>
    %40 = math.exp %39 : vector<2x96xf32>
    %cst_20 = arith.constant 1.000000e+00 : f32
    %41 = vector.broadcast %cst_20 : f32 to vector<2x96xf32>
    %42 = arith.addf %41, %40 : vector<2x96xf32>
    %43 = arith.divf %41, %42 : vector<2x96xf32>
    %44 = vector.extract_strided_slice %37 {offsets = [0, 96], sizes = [2, 32], strides = [1, 1]} : vector<2x128xf32> to vector<2x32xf32>
    %45 = math.tanh %44 : vector<2x32xf32>
    %46 = vector.extract_strided_slice %43 {offsets = [0, 0], sizes = [2, 32], strides = [1, 1]} : vector<2x96xf32> to vector<2x32xf32>
    %47 = vector.extract_strided_slice %43 {offsets = [0, 32], sizes = [2, 32], strides = [1, 1]} : vector<2x96xf32> to vector<2x32xf32>
    %48 = vector.extract_strided_slice %43 {offsets = [0, 64], sizes = [2, 32], strides = [1, 1]} : vector<2x96xf32> to vector<2x32xf32>
    %49 = arith.mulf %47, %14 : vector<2x32xf32>
    %50 = arith.mulf %46, %45 : vector<2x32xf32>
    %51 = arith.addf %49, %50 : vector<2x32xf32>
    %52 = math.tanh %51 : vector<2x32xf32>
    %53 = arith.mulf %48, %52 : vector<2x32xf32>
    %54 = vector.extract_strided_slice %5 {offsets = [2, 0], sizes = [2, 128], strides = [1, 1]} : vector<16x128xf32> to vector<2x128xf32>
    %cst_21 = arith.constant dense<0.000000e+00> : vector<2x128xf32>
    %55 = tpu.matmul %33, %6, %cst_21 {dimension_numbers = #tpu.dot_dimension_numbers<[1], [0], [0], [1], [0, 0, 1, 1], [], []>} : vector<2x32xf32>, vector<32x128xf32>, vector<2x128xf32> -> vector<2x128xf32>
    %56 = arith.addf %54, %55 : vector<2x128xf32>
    %57 = vector.extract_strided_slice %56 {offsets = [0, 0], sizes = [2, 96], strides = [1, 1]} : vector<2x128xf32> to vector<2x96xf32>
    %58 = arith.negf %57 : vector<2x96xf32>
    %59 = math.exp %58 : vector<2x96xf32>
    %cst_22 = arith.constant 1.000000e+00 : f32
    %60 = vector.broadcast %cst_22 : f32 to vector<2x96xf32>
    %61 = arith.addf %60, %59 : vector<2x96xf32>
    %62 = arith.divf %60, %61 : vector<2x96xf32>
    %63 = vector.extract_strided_slice %56 {offsets = [0, 96], sizes = [2, 32], strides = [1, 1]} : vector<2x128xf32> to vector<2x32xf32>
    %64 = math.tanh %63 : vector<2x32xf32>
    %65 = vector.extract_strided_slice %62 {offsets = [0, 0], sizes = [2, 32], strides = [1, 1]} : vector<2x96xf32> to vector<2x32xf32>
    %66 = vector.extract_strided_slice %62 {offsets = [0, 32], sizes = [2, 32], strides = [1, 1]} : vector<2x96xf32> to vector<2x32xf32>
    %67 = vector.extract_strided_slice %62 {offsets = [0, 64], sizes = [2, 32], strides = [1, 1]} : vector<2x96xf32> to vector<2x32xf32>
    %68 = arith.mulf %66, %31 : vector<2x32xf32>
    %69 = arith.mulf %65, %64 : vector<2x32xf32>
    %70 = arith.addf %68, %69 : vector<2x32xf32>
    %71 = math.tanh %70 : vector<2x32xf32>
    %72 = arith.mulf %67, %71 : vector<2x32xf32>
    %73 = tpu.concatenate %72, %53 in 1 : vector<2x32xf32>, vector<2x32xf32> -> vector<2x64xf32>
    %cst_23 = arith.constant dense<0.000000e+00> : vector<2x128xf32>
    %74 = tpu.matmul %73, %8, %cst_23 {dimension_numbers = #tpu.dot_dimension_numbers<[1], [0], [0], [1], [0, 0, 1, 1], [], []>} : vector<2x64xf32>, vector<64x128xf32>, vector<2x128xf32> -> vector<2x128xf32>
    %75 = vector.broadcast %10 : vector<1x128xf32> to vector<2x128xf32>
    %76 = arith.addf %74, %75 : vector<2x128xf32>
    %77 = vector.extract_strided_slice %76 {offsets = [0, 0], sizes = [2, 96], strides = [1, 1]} : vector<2x128xf32> to vector<2x96xf32>
    %78 = arith.negf %77 : vector<2x96xf32>
    %79 = math.exp %78 : vector<2x96xf32>
    %cst_24 = arith.constant 1.000000e+00 : f32
    %80 = vector.broadcast %cst_24 : f32 to vector<2x96xf32>
    %81 = arith.addf %80, %79 : vector<2x96xf32>
    %82 = arith.divf %80, %81 : vector<2x96xf32>
    %83 = vector.extract_strided_slice %76 {offsets = [0, 96], sizes = [2, 32], strides = [1, 1]} : vector<2x128xf32> to vector<2x32xf32>
    %84 = math.tanh %83 : vector<2x32xf32>
    %85 = vector.extract_strided_slice %82 {offsets = [0, 0], sizes = [2, 32], strides = [1, 1]} : vector<2x96xf32> to vector<2x32xf32>
    %86 = vector.extract_strided_slice %82 {offsets = [0, 32], sizes = [2, 32], strides = [1, 1]} : vector<2x96xf32> to vector<2x32xf32>
    %87 = vector.extract_strided_slice %82 {offsets = [0, 64], sizes = [2, 32], strides = [1, 1]} : vector<2x96xf32> to vector<2x32xf32>
    %88 = arith.mulf %86, %51 : vector<2x32xf32>
    %89 = arith.mulf %85, %84 : vector<2x32xf32>
    %90 = arith.addf %88, %89 : vector<2x32xf32>
    %91 = math.tanh %90 : vector<2x32xf32>
    %92 = arith.mulf %87, %91 : vector<2x32xf32>
    %93 = vector.extract_strided_slice %5 {offsets = [4, 0], sizes = [2, 128], strides = [1, 1]} : vector<16x128xf32> to vector<2x128xf32>
    %cst_25 = arith.constant dense<0.000000e+00> : vector<2x128xf32>
    %94 = tpu.matmul %72, %6, %cst_25 {dimension_numbers = #tpu.dot_dimension_numbers<[1], [0], [0], [1], [0, 0, 1, 1], [], []>} : vector<2x32xf32>, vector<32x128xf32>, vector<2x128xf32> -> vector<2x128xf32>
    %95 = arith.addf %93, %94 : vector<2x128xf32>
    %96 = vector.extract_strided_slice %95 {offsets = [0, 0], sizes = [2, 96], strides = [1, 1]} : vector<2x128xf32> to vector<2x96xf32>
    %97 = arith.negf %96 : vector<2x96xf32>
    %98 = math.exp %97 : vector<2x96xf32>
    %cst_26 = arith.constant 1.000000e+00 : f32
    %99 = vector.broadcast %cst_26 : f32 to vector<2x96xf32>
    %100 = arith.addf %99, %98 : vector<2x96xf32>
    %101 = arith.divf %99, %100 : vector<2x96xf32>
    %102 = vector.extract_strided_slice %95 {offsets = [0, 96], sizes = [2, 32], strides = [1, 1]} : vector<2x128xf32> to vector<2x32xf32>
    %103 = math.tanh %102 : vector<2x32xf32>
    %104 = vector.extract_strided_slice %101 {offsets = [0, 0], sizes = [2, 32], strides = [1, 1]} : vector<2x96xf32> to vector<2x32xf32>
    %105 = vector.extract_strided_slice %101 {offsets = [0, 32], sizes = [2, 32], strides = [1, 1]} : vector<2x96xf32> to vector<2x32xf32>
    %106 = vector.extract_strided_slice %101 {offsets = [0, 64], sizes = [2, 32], strides = [1, 1]} : vector<2x96xf32> to vector<2x32xf32>
    %107 = arith.mulf %105, %70 : vector<2x32xf32>
    %108 = arith.mulf %104, %103 : vector<2x32xf32>
    %109 = arith.addf %107, %108 : vector<2x32xf32>
    %110 = math.tanh %109 : vector<2x32xf32>
    %111 = arith.mulf %106, %110 : vector<2x32xf32>
    %112 = tpu.concatenate %111, %92 in 1 : vector<2x32xf32>, vector<2x32xf32> -> vector<2x64xf32>
    %cst_27 = arith.constant dense<0.000000e+00> : vector<2x128xf32>
    %113 = tpu.matmul %112, %8, %cst_27 {dimension_numbers = #tpu.dot_dimension_numbers<[1], [0], [0], [1], [0, 0, 1, 1], [], []>} : vector<2x64xf32>, vector<64x128xf32>, vector<2x128xf32> -> vector<2x128xf32>
    %114 = vector.broadcast %10 : vector<1x128xf32> to vector<2x128xf32>
    %115 = arith.addf %113, %114 : vector<2x128xf32>
    %116 = vector.extract_strided_slice %115 {offsets = [0, 0], sizes = [2, 96], strides = [1, 1]} : vector<2x128xf32> to vector<2x96xf32>
    %117 = arith.negf %116 : vector<2x96xf32>
    %118 = math.exp %117 : vector<2x96xf32>
    %cst_28 = arith.constant 1.000000e+00 : f32
    %119 = vector.broadcast %cst_28 : f32 to vector<2x96xf32>
    %120 = arith.addf %119, %118 : vector<2x96xf32>
    %121 = arith.divf %119, %120 : vector<2x96xf32>
    %122 = vector.extract_strided_slice %115 {offsets = [0, 96], sizes = [2, 32], strides = [1, 1]} : vector<2x128xf32> to vector<2x32xf32>
    %123 = math.tanh %122 : vector<2x32xf32>
    %124 = vector.extract_strided_slice %121 {offsets = [0, 0], sizes = [2, 32], strides = [1, 1]} : vector<2x96xf32> to vector<2x32xf32>
    %125 = vector.extract_strided_slice %121 {offsets = [0, 32], sizes = [2, 32], strides = [1, 1]} : vector<2x96xf32> to vector<2x32xf32>
    %126 = vector.extract_strided_slice %121 {offsets = [0, 64], sizes = [2, 32], strides = [1, 1]} : vector<2x96xf32> to vector<2x32xf32>
    %127 = arith.mulf %125, %90 : vector<2x32xf32>
    %128 = arith.mulf %124, %123 : vector<2x32xf32>
    %129 = arith.addf %127, %128 : vector<2x32xf32>
    %130 = math.tanh %129 : vector<2x32xf32>
    %131 = arith.mulf %126, %130 : vector<2x32xf32>
    %132 = vector.extract_strided_slice %5 {offsets = [6, 0], sizes = [2, 128], strides = [1, 1]} : vector<16x128xf32> to vector<2x128xf32>
    %cst_29 = arith.constant dense<0.000000e+00> : vector<2x128xf32>
    %133 = tpu.matmul %111, %6, %cst_29 {dimension_numbers = #tpu.dot_dimension_numbers<[1], [0], [0], [1], [0, 0, 1, 1], [], []>} : vector<2x32xf32>, vector<32x128xf32>, vector<2x128xf32> -> vector<2x128xf32>
    %134 = arith.addf %132, %133 : vector<2x128xf32>
    %135 = vector.extract_strided_slice %134 {offsets = [0, 0], sizes = [2, 96], strides = [1, 1]} : vector<2x128xf32> to vector<2x96xf32>
    %136 = arith.negf %135 : vector<2x96xf32>
    %137 = math.exp %136 : vector<2x96xf32>
    %cst_30 = arith.constant 1.000000e+00 : f32
    %138 = vector.broadcast %cst_30 : f32 to vector<2x96xf32>
    %139 = arith.addf %138, %137 : vector<2x96xf32>
    %140 = arith.divf %138, %139 : vector<2x96xf32>
    %141 = vector.extract_strided_slice %134 {offsets = [0, 96], sizes = [2, 32], strides = [1, 1]} : vector<2x128xf32> to vector<2x32xf32>
    %142 = math.tanh %141 : vector<2x32xf32>
    %143 = vector.extract_strided_slice %140 {offsets = [0, 0], sizes = [2, 32], strides = [1, 1]} : vector<2x96xf32> to vector<2x32xf32>
    %144 = vector.extract_strided_slice %140 {offsets = [0, 32], sizes = [2, 32], strides = [1, 1]} : vector<2x96xf32> to vector<2x32xf32>
    %145 = vector.extract_strided_slice %140 {offsets = [0, 64], sizes = [2, 32], strides = [1, 1]} : vector<2x96xf32> to vector<2x32xf32>
    %146 = arith.mulf %144, %109 : vector<2x32xf32>
    %147 = arith.mulf %143, %142 : vector<2x32xf32>
    %148 = arith.addf %146, %147 : vector<2x32xf32>
    %149 = math.tanh %148 : vector<2x32xf32>
    %150 = arith.mulf %145, %149 : vector<2x32xf32>
    %151 = tpu.concatenate %150, %131 in 1 : vector<2x32xf32>, vector<2x32xf32> -> vector<2x64xf32>
    %cst_31 = arith.constant dense<0.000000e+00> : vector<2x128xf32>
    %152 = tpu.matmul %151, %8, %cst_31 {dimension_numbers = #tpu.dot_dimension_numbers<[1], [0], [0], [1], [0, 0, 1, 1], [], []>} : vector<2x64xf32>, vector<64x128xf32>, vector<2x128xf32> -> vector<2x128xf32>
    %153 = vector.broadcast %10 : vector<1x128xf32> to vector<2x128xf32>
    %154 = arith.addf %152, %153 : vector<2x128xf32>
    %155 = vector.extract_strided_slice %154 {offsets = [0, 0], sizes = [2, 96], strides = [1, 1]} : vector<2x128xf32> to vector<2x96xf32>
    %156 = arith.negf %155 : vector<2x96xf32>
    %157 = math.exp %156 : vector<2x96xf32>
    %cst_32 = arith.constant 1.000000e+00 : f32
    %158 = vector.broadcast %cst_32 : f32 to vector<2x96xf32>
    %159 = arith.addf %158, %157 : vector<2x96xf32>
    %160 = arith.divf %158, %159 : vector<2x96xf32>
    %161 = vector.extract_strided_slice %154 {offsets = [0, 96], sizes = [2, 32], strides = [1, 1]} : vector<2x128xf32> to vector<2x32xf32>
    %162 = math.tanh %161 : vector<2x32xf32>
    %163 = vector.extract_strided_slice %160 {offsets = [0, 0], sizes = [2, 32], strides = [1, 1]} : vector<2x96xf32> to vector<2x32xf32>
    %164 = vector.extract_strided_slice %160 {offsets = [0, 32], sizes = [2, 32], strides = [1, 1]} : vector<2x96xf32> to vector<2x32xf32>
    %165 = vector.extract_strided_slice %160 {offsets = [0, 64], sizes = [2, 32], strides = [1, 1]} : vector<2x96xf32> to vector<2x32xf32>
    %166 = arith.mulf %164, %129 : vector<2x32xf32>
    %167 = arith.mulf %163, %162 : vector<2x32xf32>
    %168 = arith.addf %166, %167 : vector<2x32xf32>
    %169 = math.tanh %168 : vector<2x32xf32>
    %170 = arith.mulf %165, %169 : vector<2x32xf32>
    %171 = vector.extract_strided_slice %5 {offsets = [8, 0], sizes = [2, 128], strides = [1, 1]} : vector<16x128xf32> to vector<2x128xf32>
    %cst_33 = arith.constant dense<0.000000e+00> : vector<2x128xf32>
    %172 = tpu.matmul %150, %6, %cst_33 {dimension_numbers = #tpu.dot_dimension_numbers<[1], [0], [0], [1], [0, 0, 1, 1], [], []>} : vector<2x32xf32>, vector<32x128xf32>, vector<2x128xf32> -> vector<2x128xf32>
    %173 = arith.addf %171, %172 : vector<2x128xf32>
    %174 = vector.extract_strided_slice %173 {offsets = [0, 0], sizes = [2, 96], strides = [1, 1]} : vector<2x128xf32> to vector<2x96xf32>
    %175 = arith.negf %174 : vector<2x96xf32>
    %176 = math.exp %175 : vector<2x96xf32>
    %cst_34 = arith.constant 1.000000e+00 : f32
    %177 = vector.broadcast %cst_34 : f32 to vector<2x96xf32>
    %178 = arith.addf %177, %176 : vector<2x96xf32>
    %179 = arith.divf %177, %178 : vector<2x96xf32>
    %180 = vector.extract_strided_slice %173 {offsets = [0, 96], sizes = [2, 32], strides = [1, 1]} : vector<2x128xf32> to vector<2x32xf32>
    %181 = math.tanh %180 : vector<2x32xf32>
    %182 = vector.extract_strided_slice %179 {offsets = [0, 0], sizes = [2, 32], strides = [1, 1]} : vector<2x96xf32> to vector<2x32xf32>
    %183 = vector.extract_strided_slice %179 {offsets = [0, 32], sizes = [2, 32], strides = [1, 1]} : vector<2x96xf32> to vector<2x32xf32>
    %184 = vector.extract_strided_slice %179 {offsets = [0, 64], sizes = [2, 32], strides = [1, 1]} : vector<2x96xf32> to vector<2x32xf32>
    %185 = arith.mulf %183, %148 : vector<2x32xf32>
    %186 = arith.mulf %182, %181 : vector<2x32xf32>
    %187 = arith.addf %185, %186 : vector<2x32xf32>
    %188 = math.tanh %187 : vector<2x32xf32>
    %189 = arith.mulf %184, %188 : vector<2x32xf32>
    %190 = tpu.concatenate %189, %170 in 1 : vector<2x32xf32>, vector<2x32xf32> -> vector<2x64xf32>
    %cst_35 = arith.constant dense<0.000000e+00> : vector<2x128xf32>
    %191 = tpu.matmul %190, %8, %cst_35 {dimension_numbers = #tpu.dot_dimension_numbers<[1], [0], [0], [1], [0, 0, 1, 1], [], []>} : vector<2x64xf32>, vector<64x128xf32>, vector<2x128xf32> -> vector<2x128xf32>
    %192 = vector.broadcast %10 : vector<1x128xf32> to vector<2x128xf32>
    %193 = arith.addf %191, %192 : vector<2x128xf32>
    %194 = vector.extract_strided_slice %193 {offsets = [0, 0], sizes = [2, 96], strides = [1, 1]} : vector<2x128xf32> to vector<2x96xf32>
    %195 = arith.negf %194 : vector<2x96xf32>
    %196 = math.exp %195 : vector<2x96xf32>
    %cst_36 = arith.constant 1.000000e+00 : f32
    %197 = vector.broadcast %cst_36 : f32 to vector<2x96xf32>
    %198 = arith.addf %197, %196 : vector<2x96xf32>
    %199 = arith.divf %197, %198 : vector<2x96xf32>
    %200 = vector.extract_strided_slice %193 {offsets = [0, 96], sizes = [2, 32], strides = [1, 1]} : vector<2x128xf32> to vector<2x32xf32>
    %201 = math.tanh %200 : vector<2x32xf32>
    %202 = vector.extract_strided_slice %199 {offsets = [0, 0], sizes = [2, 32], strides = [1, 1]} : vector<2x96xf32> to vector<2x32xf32>
    %203 = vector.extract_strided_slice %199 {offsets = [0, 32], sizes = [2, 32], strides = [1, 1]} : vector<2x96xf32> to vector<2x32xf32>
    %204 = vector.extract_strided_slice %199 {offsets = [0, 64], sizes = [2, 32], strides = [1, 1]} : vector<2x96xf32> to vector<2x32xf32>
    %205 = arith.mulf %203, %168 : vector<2x32xf32>
    %206 = arith.mulf %202, %201 : vector<2x32xf32>
    %207 = arith.addf %205, %206 : vector<2x32xf32>
    %208 = math.tanh %207 : vector<2x32xf32>
    %209 = arith.mulf %204, %208 : vector<2x32xf32>
    %210 = vector.extract_strided_slice %5 {offsets = [10, 0], sizes = [2, 128], strides = [1, 1]} : vector<16x128xf32> to vector<2x128xf32>
    %cst_37 = arith.constant dense<0.000000e+00> : vector<2x128xf32>
    %211 = tpu.matmul %189, %6, %cst_37 {dimension_numbers = #tpu.dot_dimension_numbers<[1], [0], [0], [1], [0, 0, 1, 1], [], []>} : vector<2x32xf32>, vector<32x128xf32>, vector<2x128xf32> -> vector<2x128xf32>
    %212 = arith.addf %210, %211 : vector<2x128xf32>
    %213 = vector.extract_strided_slice %212 {offsets = [0, 0], sizes = [2, 96], strides = [1, 1]} : vector<2x128xf32> to vector<2x96xf32>
    %214 = arith.negf %213 : vector<2x96xf32>
    %215 = math.exp %214 : vector<2x96xf32>
    %cst_38 = arith.constant 1.000000e+00 : f32
    %216 = vector.broadcast %cst_38 : f32 to vector<2x96xf32>
    %217 = arith.addf %216, %215 : vector<2x96xf32>
    %218 = arith.divf %216, %217 : vector<2x96xf32>
    %219 = vector.extract_strided_slice %212 {offsets = [0, 96], sizes = [2, 32], strides = [1, 1]} : vector<2x128xf32> to vector<2x32xf32>
    %220 = math.tanh %219 : vector<2x32xf32>
    %221 = vector.extract_strided_slice %218 {offsets = [0, 0], sizes = [2, 32], strides = [1, 1]} : vector<2x96xf32> to vector<2x32xf32>
    %222 = vector.extract_strided_slice %218 {offsets = [0, 32], sizes = [2, 32], strides = [1, 1]} : vector<2x96xf32> to vector<2x32xf32>
    %223 = vector.extract_strided_slice %218 {offsets = [0, 64], sizes = [2, 32], strides = [1, 1]} : vector<2x96xf32> to vector<2x32xf32>
    %224 = arith.mulf %222, %187 : vector<2x32xf32>
    %225 = arith.mulf %221, %220 : vector<2x32xf32>
    %226 = arith.addf %224, %225 : vector<2x32xf32>
    %227 = math.tanh %226 : vector<2x32xf32>
    %228 = arith.mulf %223, %227 : vector<2x32xf32>
    %229 = tpu.concatenate %228, %209 in 1 : vector<2x32xf32>, vector<2x32xf32> -> vector<2x64xf32>
    %cst_39 = arith.constant dense<0.000000e+00> : vector<2x128xf32>
    %230 = tpu.matmul %229, %8, %cst_39 {dimension_numbers = #tpu.dot_dimension_numbers<[1], [0], [0], [1], [0, 0, 1, 1], [], []>} : vector<2x64xf32>, vector<64x128xf32>, vector<2x128xf32> -> vector<2x128xf32>
    %231 = vector.broadcast %10 : vector<1x128xf32> to vector<2x128xf32>
    %232 = arith.addf %230, %231 : vector<2x128xf32>
    %233 = vector.extract_strided_slice %232 {offsets = [0, 0], sizes = [2, 96], strides = [1, 1]} : vector<2x128xf32> to vector<2x96xf32>
    %234 = arith.negf %233 : vector<2x96xf32>
    %235 = math.exp %234 : vector<2x96xf32>
    %cst_40 = arith.constant 1.000000e+00 : f32
    %236 = vector.broadcast %cst_40 : f32 to vector<2x96xf32>
    %237 = arith.addf %236, %235 : vector<2x96xf32>
    %238 = arith.divf %236, %237 : vector<2x96xf32>
    %239 = vector.extract_strided_slice %232 {offsets = [0, 96], sizes = [2, 32], strides = [1, 1]} : vector<2x128xf32> to vector<2x32xf32>
    %240 = math.tanh %239 : vector<2x32xf32>
    %241 = vector.extract_strided_slice %238 {offsets = [0, 0], sizes = [2, 32], strides = [1, 1]} : vector<2x96xf32> to vector<2x32xf32>
    %242 = vector.extract_strided_slice %238 {offsets = [0, 32], sizes = [2, 32], strides = [1, 1]} : vector<2x96xf32> to vector<2x32xf32>
    %243 = vector.extract_strided_slice %238 {offsets = [0, 64], sizes = [2, 32], strides = [1, 1]} : vector<2x96xf32> to vector<2x32xf32>
    %244 = arith.mulf %242, %207 : vector<2x32xf32>
    %245 = arith.mulf %241, %240 : vector<2x32xf32>
    %246 = arith.addf %244, %245 : vector<2x32xf32>
    %247 = math.tanh %246 : vector<2x32xf32>
    %248 = arith.mulf %243, %247 : vector<2x32xf32>
    %249 = vector.extract_strided_slice %5 {offsets = [12, 0], sizes = [2, 128], strides = [1, 1]} : vector<16x128xf32> to vector<2x128xf32>
    %cst_41 = arith.constant dense<0.000000e+00> : vector<2x128xf32>
    %250 = tpu.matmul %228, %6, %cst_41 {dimension_numbers = #tpu.dot_dimension_numbers<[1], [0], [0], [1], [0, 0, 1, 1], [], []>} : vector<2x32xf32>, vector<32x128xf32>, vector<2x128xf32> -> vector<2x128xf32>
    %251 = arith.addf %249, %250 : vector<2x128xf32>
    %252 = vector.extract_strided_slice %251 {offsets = [0, 0], sizes = [2, 96], strides = [1, 1]} : vector<2x128xf32> to vector<2x96xf32>
    %253 = arith.negf %252 : vector<2x96xf32>
    %254 = math.exp %253 : vector<2x96xf32>
    %cst_42 = arith.constant 1.000000e+00 : f32
    %255 = vector.broadcast %cst_42 : f32 to vector<2x96xf32>
    %256 = arith.addf %255, %254 : vector<2x96xf32>
    %257 = arith.divf %255, %256 : vector<2x96xf32>
    %258 = vector.extract_strided_slice %251 {offsets = [0, 96], sizes = [2, 32], strides = [1, 1]} : vector<2x128xf32> to vector<2x32xf32>
    %259 = math.tanh %258 : vector<2x32xf32>
    %260 = vector.extract_strided_slice %257 {offsets = [0, 0], sizes = [2, 32], strides = [1, 1]} : vector<2x96xf32> to vector<2x32xf32>
    %261 = vector.extract_strided_slice %257 {offsets = [0, 32], sizes = [2, 32], strides = [1, 1]} : vector<2x96xf32> to vector<2x32xf32>
    %262 = vector.extract_strided_slice %257 {offsets = [0, 64], sizes = [2, 32], strides = [1, 1]} : vector<2x96xf32> to vector<2x32xf32>
    %263 = arith.mulf %261, %226 : vector<2x32xf32>
    %264 = arith.mulf %260, %259 : vector<2x32xf32>
    %265 = arith.addf %263, %264 : vector<2x32xf32>
    %266 = math.tanh %265 : vector<2x32xf32>
    %267 = arith.mulf %262, %266 : vector<2x32xf32>
    %268 = tpu.concatenate %267, %248 in 1 : vector<2x32xf32>, vector<2x32xf32> -> vector<2x64xf32>
    %cst_43 = arith.constant dense<0.000000e+00> : vector<2x128xf32>
    %269 = tpu.matmul %268, %8, %cst_43 {dimension_numbers = #tpu.dot_dimension_numbers<[1], [0], [0], [1], [0, 0, 1, 1], [], []>} : vector<2x64xf32>, vector<64x128xf32>, vector<2x128xf32> -> vector<2x128xf32>
    %270 = vector.broadcast %10 : vector<1x128xf32> to vector<2x128xf32>
    %271 = arith.addf %269, %270 : vector<2x128xf32>
    %272 = vector.extract_strided_slice %271 {offsets = [0, 0], sizes = [2, 96], strides = [1, 1]} : vector<2x128xf32> to vector<2x96xf32>
    %273 = arith.negf %272 : vector<2x96xf32>
    %274 = math.exp %273 : vector<2x96xf32>
    %cst_44 = arith.constant 1.000000e+00 : f32
    %275 = vector.broadcast %cst_44 : f32 to vector<2x96xf32>
    %276 = arith.addf %275, %274 : vector<2x96xf32>
    %277 = arith.divf %275, %276 : vector<2x96xf32>
    %278 = vector.extract_strided_slice %271 {offsets = [0, 96], sizes = [2, 32], strides = [1, 1]} : vector<2x128xf32> to vector<2x32xf32>
    %279 = math.tanh %278 : vector<2x32xf32>
    %280 = vector.extract_strided_slice %277 {offsets = [0, 0], sizes = [2, 32], strides = [1, 1]} : vector<2x96xf32> to vector<2x32xf32>
    %281 = vector.extract_strided_slice %277 {offsets = [0, 32], sizes = [2, 32], strides = [1, 1]} : vector<2x96xf32> to vector<2x32xf32>
    %282 = vector.extract_strided_slice %277 {offsets = [0, 64], sizes = [2, 32], strides = [1, 1]} : vector<2x96xf32> to vector<2x32xf32>
    %283 = arith.mulf %281, %246 : vector<2x32xf32>
    %284 = arith.mulf %280, %279 : vector<2x32xf32>
    %285 = arith.addf %283, %284 : vector<2x32xf32>
    %286 = math.tanh %285 : vector<2x32xf32>
    %287 = arith.mulf %282, %286 : vector<2x32xf32>
    %288 = vector.extract_strided_slice %5 {offsets = [14, 0], sizes = [2, 128], strides = [1, 1]} : vector<16x128xf32> to vector<2x128xf32>
    %cst_45 = arith.constant dense<0.000000e+00> : vector<2x128xf32>
    %289 = tpu.matmul %267, %6, %cst_45 {dimension_numbers = #tpu.dot_dimension_numbers<[1], [0], [0], [1], [0, 0, 1, 1], [], []>} : vector<2x32xf32>, vector<32x128xf32>, vector<2x128xf32> -> vector<2x128xf32>
    %290 = arith.addf %288, %289 : vector<2x128xf32>
    %291 = vector.extract_strided_slice %290 {offsets = [0, 0], sizes = [2, 96], strides = [1, 1]} : vector<2x128xf32> to vector<2x96xf32>
    %292 = arith.negf %291 : vector<2x96xf32>
    %293 = math.exp %292 : vector<2x96xf32>
    %cst_46 = arith.constant 1.000000e+00 : f32
    %294 = vector.broadcast %cst_46 : f32 to vector<2x96xf32>
    %295 = arith.addf %294, %293 : vector<2x96xf32>
    %296 = arith.divf %294, %295 : vector<2x96xf32>
    %297 = vector.extract_strided_slice %290 {offsets = [0, 96], sizes = [2, 32], strides = [1, 1]} : vector<2x128xf32> to vector<2x32xf32>
    %298 = math.tanh %297 : vector<2x32xf32>
    %299 = vector.extract_strided_slice %296 {offsets = [0, 0], sizes = [2, 32], strides = [1, 1]} : vector<2x96xf32> to vector<2x32xf32>
    %300 = vector.extract_strided_slice %296 {offsets = [0, 32], sizes = [2, 32], strides = [1, 1]} : vector<2x96xf32> to vector<2x32xf32>
    %301 = vector.extract_strided_slice %296 {offsets = [0, 64], sizes = [2, 32], strides = [1, 1]} : vector<2x96xf32> to vector<2x32xf32>
    %302 = arith.mulf %300, %265 : vector<2x32xf32>
    %303 = arith.mulf %299, %298 : vector<2x32xf32>
    %304 = arith.addf %302, %303 : vector<2x32xf32>
    %305 = math.tanh %304 : vector<2x32xf32>
    %306 = arith.mulf %301, %305 : vector<2x32xf32>
    %307 = tpu.concatenate %306, %287 in 1 : vector<2x32xf32>, vector<2x32xf32> -> vector<2x64xf32>
    %cst_47 = arith.constant dense<0.000000e+00> : vector<2x128xf32>
    %308 = tpu.matmul %307, %8, %cst_47 {dimension_numbers = #tpu.dot_dimension_numbers<[1], [0], [0], [1], [0, 0, 1, 1], [], []>} : vector<2x64xf32>, vector<64x128xf32>, vector<2x128xf32> -> vector<2x128xf32>
    %309 = vector.broadcast %10 : vector<1x128xf32> to vector<2x128xf32>
    %310 = arith.addf %308, %309 : vector<2x128xf32>
    %311 = vector.extract_strided_slice %310 {offsets = [0, 0], sizes = [2, 96], strides = [1, 1]} : vector<2x128xf32> to vector<2x96xf32>
    %312 = arith.negf %311 : vector<2x96xf32>
    %313 = math.exp %312 : vector<2x96xf32>
    %cst_48 = arith.constant 1.000000e+00 : f32
    %314 = vector.broadcast %cst_48 : f32 to vector<2x96xf32>
    %315 = arith.addf %314, %313 : vector<2x96xf32>
    %316 = arith.divf %314, %315 : vector<2x96xf32>
    %317 = vector.extract_strided_slice %310 {offsets = [0, 96], sizes = [2, 32], strides = [1, 1]} : vector<2x128xf32> to vector<2x32xf32>
    %318 = math.tanh %317 : vector<2x32xf32>
    %319 = vector.extract_strided_slice %316 {offsets = [0, 0], sizes = [2, 32], strides = [1, 1]} : vector<2x96xf32> to vector<2x32xf32>
    %320 = vector.extract_strided_slice %316 {offsets = [0, 32], sizes = [2, 32], strides = [1, 1]} : vector<2x96xf32> to vector<2x32xf32>
    %321 = vector.extract_strided_slice %316 {offsets = [0, 64], sizes = [2, 32], strides = [1, 1]} : vector<2x96xf32> to vector<2x32xf32>
    %322 = arith.mulf %320, %285 : vector<2x32xf32>
    %323 = arith.mulf %319, %318 : vector<2x32xf32>
    %324 = arith.addf %322, %323 : vector<2x32xf32>
    %325 = math.tanh %324 : vector<2x32xf32>
    %326 = arith.mulf %321, %325 : vector<2x32xf32>
    %327 = tpu.concatenate %53, %92, %131, %170, %209, %248, %287, %326 in 0 : vector<2x32xf32>, vector<2x32xf32>, vector<2x32xf32>, vector<2x32xf32>, vector<2x32xf32>, vector<2x32xf32>, vector<2x32xf32>, vector<2x32xf32> -> vector<16x32xf32>
    %c0_49 = arith.constant 0 : index
    %c0_50 = arith.constant 0 : index
    %328 = vector.load %arg6[%c0_49, %c0_50] : memref<32x132xf32, #tpu.memory_space<vmem>>, vector<32x132xf32>
    %cst_51 = arith.constant dense<0.000000e+00> : vector<16x132xf32>
    %329 = tpu.matmul %327, %328, %cst_51 {dimension_numbers = #tpu.dot_dimension_numbers<[1], [0], [0], [1], [0, 0, 1, 1], [], []>} : vector<16x32xf32>, vector<32x132xf32>, vector<16x132xf32> -> vector<16x132xf32>
    %c0_52 = arith.constant 0 : index
    %c0_53 = arith.constant 0 : index
    %330 = vector.load %arg7[%c0_52, %c0_53] : memref<1x132xf32, #tpu.memory_space<vmem>>, vector<1x132xf32>
    %331 = vector.broadcast %330 : vector<1x132xf32> to vector<16x132xf32>
    %332 = arith.addf %329, %331 : vector<16x132xf32>
    %c0_54 = arith.constant 0 : index
    %c0_55 = arith.constant 0 : index
    %333 = vector.load %arg8[%c0_54, %c0_55] : memref<16x132xf32, #tpu.memory_space<vmem>>, vector<16x132xf32>
    tpu.vector_store %arg8[%c0_54, %c0_55], %332 {strides = array<i32>} : memref<16x132xf32, #tpu.memory_space<vmem>>, vector<16x132xf32>,
    %c0_56 = arith.constant 0 : index
    %c0_57 = arith.constant 0 : index
    %c0_58 = arith.constant 0 : index
    %334 = vector.load %arg9[%c0_56, %c0_57, %c0_58] : memref<2x2x32xf32, #tpu.memory_space<vmem>>, vector<1x2x32xf32>
    %335 = vector.shape_cast %334 : vector<1x2x32xf32> to vector<2x32xf32>
    %336 = vector.shape_cast %306 : vector<2x32xf32> to vector<1x2x32xf32>
    tpu.vector_store %arg9[%c0_56, %c0_57, %c0_58], %336 {strides = array<i32>} : memref<2x2x32xf32, #tpu.memory_space<vmem>>, vector<1x2x32xf32>,
    %c0_59 = arith.constant 0 : index
    %c0_60 = arith.constant 0 : index
    %c0_61 = arith.constant 0 : index
    %337 = vector.load %arg10[%c0_59, %c0_60, %c0_61] : memref<2x2x32xf32, #tpu.memory_space<vmem>>, vector<1x2x32xf32>
    %338 = vector.shape_cast %337 : vector<1x2x32xf32> to vector<2x32xf32>
    %339 = vector.shape_cast %304 : vector<2x32xf32> to vector<1x2x32xf32>
    tpu.vector_store %arg10[%c0_59, %c0_60, %c0_61], %339 {strides = array<i32>} : memref<2x2x32xf32, #tpu.memory_space<vmem>>, vector<1x2x32xf32>,
    %c1 = arith.constant 1 : index
    %c0_62 = arith.constant 0 : index
    %c0_63 = arith.constant 0 : index
    %340 = vector.load %arg9[%c1, %c0_62, %c0_63] : memref<2x2x32xf32, #tpu.memory_space<vmem>>, vector<1x2x32xf32>
    %341 = vector.shape_cast %340 : vector<1x2x32xf32> to vector<2x32xf32>
    %342 = vector.shape_cast %326 : vector<2x32xf32> to vector<1x2x32xf32>
    tpu.vector_store %arg9[%c1, %c0_62, %c0_63], %342 {strides = array<i32>} : memref<2x2x32xf32, #tpu.memory_space<vmem>>, vector<1x2x32xf32>,
    %c1_64 = arith.constant 1 : index
    %c0_65 = arith.constant 0 : index
    %c0_66 = arith.constant 0 : index
    %343 = vector.load %arg10[%c1_64, %c0_65, %c0_66] : memref<2x2x32xf32, #tpu.memory_space<vmem>>, vector<1x2x32xf32>
    %344 = vector.shape_cast %343 : vector<1x2x32xf32> to vector<2x32xf32>
    %345 = vector.shape_cast %324 : vector<2x32xf32> to vector<1x2x32xf32>
    tpu.vector_store %arg10[%c1_64, %c0_65, %c0_66], %345 {strides = array<i32>} : memref<2x2x32xf32, #tpu.memory_space<vmem>>, vector<1x2x32xf32>,
    return
  }
}

</mosaic_0001>

<llo_original>
// kernel: mdnrnn_forward.1
$region0: #{mdnrnn_forward.1}
  #allocation0 [shape = 'u32[]', space=smem, size = 0x4, offset = 0x4, fixed_abs, tag = 'smem constant byte address 0x4 - core index']
  #allocation1 [shape = 'u32[144,128]{1,0:T(1,128)}', space=vmem, size = 0x12000, scoped, tag = 'internal scratch']
  %s0 = inlined_call_operand.vmem [shape: f32[16,16], index: 0, kind: input, shape index: {}]
  %s1 = inlined_call_operand.vmem [shape: f32[16,128], index: 1, kind: input, shape index: {}]
  %s2 = inlined_call_operand.vmem [shape: f32[32,128], index: 2, kind: input, shape index: {}]
  %s3 = inlined_call_operand.vmem [shape: f32[1,128], index: 3, kind: input, shape index: {}]
  %s4 = inlined_call_operand.vmem [shape: f32[1,64,128], index: 4, kind: input, shape index: {}]
  %s5 = inlined_call_operand.vmem [shape: f32[1,1,128], index: 5, kind: input, shape index: {}]
  %s6 = inlined_call_operand.vmem [shape: f32[32,132], index: 6, kind: input, shape index: {}]
  %s7 = inlined_call_operand.vmem [shape: f32[1,132], index: 7, kind: input, shape index: {}]
  %s8 = inlined_call_operand.vmem [shape: f32[16,132], index: 8, kind: output, shape index: {0}]
  %s9 = inlined_call_operand.hbm [shape: f32[2,2,32], index: 9, kind: output, shape index: {1}]
  %s10 = inlined_call_operand.hbm [shape: f32[2,2,32], index: 10, kind: output, shape index: {2}]
  %11 = xla_tuple %s8, %s9, %s10
  %s12 = sld [smem:[#allocation0]]
  $region58: #{mdnrnn_forward.1} parent=0
    _
  %s14 = ssub.s32 1, %s12
  %s15 = scalar_select 0, %s14, %s12
  $region1: #{mdnrnn_forward.1} parent=0
    #allocation2 [shape = 'u8[2048]{0}', space=vmem, size = 0x800, scoped, tag = 'output window, operand 1, single buffered']
    #allocation3 [shape = 's32[1]{0}', space=sflag, size = 0x4, scoped, tag = 'scoped memory for mdnrnn_forward.1']
    #allocation4 [shape = 'u8[2048]{0}', space=vmem, size = 0x800, scoped, tag = 'output window, operand 2, single buffered']
    #allocation5 [shape = 's32[1]{0}', space=sflag, size = 0x4, scoped, tag = 'scoped memory for mdnrnn_forward.1']
    %16 = vsyncpa [#allocation3], 0
    %17 = vsyncpa [#allocation5], 0
    // Predicated region
    $region2: #{mdnrnn_forward.1} parent=1 // pred_check
      _
    $region3: #{mdnrnn_forward.1} parent=1 // pred_check_branch
      %19 = sbr.rel (0) target = $region5
    $region4: #{mdnrnn_forward.1} parent=1 // pred_region
      _
    $region5: #{mdnrnn_forward.1} parent=1 // pred_fallthru
      _
    // Predicated region
    $region6: #{mdnrnn_forward.1} parent=1 // pred_check
      _
    $region7: #{mdnrnn_forward.1} parent=1 // pred_check_branch
      %21 = sbr.rel (0) target = $region9
    $region8: #{mdnrnn_forward.1} parent=1 // pred_region
      _
    $region9: #{mdnrnn_forward.1} parent=1 // pred_fallthru
      _
    // Predicated region
    $region10: #{mdnrnn_forward.1} parent=1 // pred_check
      _
    $region11: #{mdnrnn_forward.1} parent=1 // pred_check_branch
      %23 = sbr.rel (0) target = $region13
    $region12: #{mdnrnn_forward.1} parent=1 // pred_region
      _
    $region13: #{mdnrnn_forward.1} parent=1 // pred_fallthru
      _
    // Predicated region
    $region14: #{mdnrnn_forward.1} parent=1 // pred_check
      _
    $region15: #{mdnrnn_forward.1} parent=1 // pred_check_branch
      %25 = sbr.rel (0) target = $region17
    $region16: #{mdnrnn_forward.1} parent=1 // pred_region
      _
    $region17: #{mdnrnn_forward.1} parent=1 // pred_fallthru
      _
    // Predicated region
    $region18: #{mdnrnn_forward.1} parent=1 // pred_check
      _
    $region19: #{mdnrnn_forward.1} parent=1 // pred_check_branch
      %27 = sbr.rel (0) target = $region21
    $region20: #{mdnrnn_forward.1} parent=1 // pred_region
      _
    $region21: #{mdnrnn_forward.1} parent=1 // pred_fallthru
      _
    // Predicated region
    $region22: #{mdnrnn_forward.1} parent=1 // pred_check
      _
    $region23: #{mdnrnn_forward.1} parent=1 // pred_check_branch
      %29 = sbr.rel (0) target = $region25
    $region24: #{mdnrnn_forward.1} parent=1 // pred_region
      _
    $region25: #{mdnrnn_forward.1} parent=1 // pred_fallthru
      _
    // Predicated region
    $region26: #{mdnrnn_forward.1} parent=1 // pred_check
      _
    $region27: #{mdnrnn_forward.1} parent=1 // pred_check_branch
      %31 = sbr.rel (0) target = $region29
    $region28: #{mdnrnn_forward.1} parent=1 // pred_region
      _
    $region29: #{mdnrnn_forward.1} parent=1 // pred_fallthru
      _
    // Predicated region
    $region30: #{mdnrnn_forward.1} parent=1 // pred_check
      _
    $region31: #{mdnrnn_forward.1} parent=1 // pred_check_branch
      %33 = sbr.rel (0) target = $region33
    $region32: #{mdnrnn_forward.1} parent=1 // pred_region
      _
    $region33: #{mdnrnn_forward.1} parent=1 // pred_fallthru
      _
    %v34 = vld [vmem:[%s0] sm:$0xff]
    %v35 = vld [vmem:[%s0 + $0x8] sm:$0xff]
    %v36 = vld [vmem:[%s1] sm:$0xff]
    %v37 = vld [vmem:[%s1 + $0x8] sm:$0xff]
    %v38 = vld [vmem:[%s3] sm:$0x1]
    %v40 = vlaneseq
    %v41 = vshrl.u32 %v40, 7
    %v42 = vsub.s32 0, %v41
    %v43 = vrot.slane %v38, %v42
    %vm45 = vcmask 130048
    %v47 = vsel %vm45, %v34, 0
    %v50 = vsel %vm45, %v35, 0
    %52 = vmatprep.subr.mxu0 0.0
    %53 = vmatpush1.msra.mxu0 %v36
    %54 = vmatprep.subr.mxu0 0.0
    %55 = vmatpush1.msra.mxu0 %v37
    %56 = vmatprep.subr.mxu0 0.0
    %57 = vmatpush1.msra.mxu0 0.0
    %58 = vmatprep.subr.mxu0 0.0
    %59 = vmatpush1.msra.mxu0 0.0
    %60 = vmatprep.subr.mxu0 0.0
    %61 = vmatpush1.msra.mxu0 0.0
    %62 = vmatprep.subr.mxu0 0.0
    %63 = vmatpush1.msra.mxu0 0.0
    %64 = vmatprep.subr.mxu0 0.0
    %65 = vmatpush1.msra.mxu0 0.0
    %66 = vmatprep.subr.mxu0 0.0
    %67 = vmatpush1.msra.mxu0 0.0
    %68 = vmatprep.subr.mxu0 0.0
    %69 = vmatpush1.msra.mxu0 0.0
    %70 = vmatprep.subr.mxu0 0.0
    %71 = vmatpush1.msra.mxu0 0.0
    %72 = vmatprep.subr.mxu0 0.0
    %73 = vmatpush1.msra.mxu0 0.0
    %74 = vmatprep.subr.mxu0 0.0
    %75 = vmatpush1.msra.mxu0 0.0
    %76 = vmatprep.subr.mxu0 0.0
    %77 = vmatpush1.msra.mxu0 0.0
    %78 = vmatprep.subr.mxu0 0.0
    %79 = vmatpush1.msra.mxu0 0.0
    %80 = vmatprep.subr.mxu0 0.0
    %81 = vmatpush1.msra.mxu0 0.0
    %82 = vmatprep.subr.mxu0 0.0
    %83 = vmatpush1.msra.mxu0 0.0
    %84 = vmatprep.subr.mxu0 0.0
    %85 = vmatpush1.msra.mxu0 0.0
    %86 = vmatprep.subr.mxu0 0.0
    %87 = vmatpush1.msra.mxu0 0.0
    %88 = vmatprep.subr.mxu0 0.0
    %89 = vmatpush1.msra.mxu0 0.0
    %90 = vmatprep.subr.mxu0 0.0
    %91 = vmatpush1.msra.mxu0 0.0
    %92 = vmatprep.subr.mxu0 0.0
    %93 = vmatpush1.msra.mxu0 0.0
    %94 = vmatprep.subr.mxu0 0.0
    %95 = vmatpush1.msra.mxu0 0.0
    %96 = vmatprep.subr.mxu0 0.0
    %97 = vmatpush1.msra.mxu0 0.0
    %98 = vmatprep.subr.mxu0 0.0
    %99 = vmatpush1.msra.mxu0 0.0
    %100 = vmatprep.subr.mxu0 0.0
    %101 = vmatpush1.msra.mxu0 0.0
    %102 = vmatprep.subr.mxu0 0.0
    %103 = vmatpush1.msra.mxu0 0.0
    %104 = vmatprep.subr.mxu0 0.0
    %105 = vmatpush1.msra.mxu0 0.0
    %106 = vmatprep.subr.mxu0 0.0
    %107 = vmatpush1.msra.mxu0 0.0
    %108 = vmatprep.subr.mxu0 0.0
    %109 = vmatpush1.msra.mxu0 0.0
    %110 = vmatprep.subr.mxu0 0.0
    %111 = vmatpush1.msra.mxu0 0.0
    %112 = vmatprep.subr.mxu0 0.0
    %113 = vmatpush1.msra.mxu0 0.0
    %114 = vmatprep.subr.mxu0 0.0
    %115 = vmatpush1.msra.mxu0 0.0
    %116 = vmatprep.mubr.f32.mxu0 0.0
    %117 = vmatmul.mubr.f32.gmra.mrb[0].mxu0 %v47
    %v118 = vpop.f32.mrb[0].mxu0
    %v119 = vadd.f32 %v43, %v118
    %v120 = vpop.f32.mrb[0].mxu0
    %121 = vmatprep.mubr.f32.mxu0 0.0
    %122 = vmatmul.mubr.f32.gmra.mrb[0].mxu0 %v50
    %v123 = vpop.f32.mrb[0].mxu0
    %v124 = vadd.f32 %v43, %v123
    %v125 = vpop.f32.mrb[0].mxu0
    %126 = vdwg.mxu0
    %v127 = vld [vmem:[%s2] sm:$0xff]
    %v128 = vld [vmem:[%s2 + $0x8] sm:$0xff]
    %v129 = vld [vmem:[%s2 + $0x10] sm:$0xff]
    %v130 = vld [vmem:[%s2 + $0x18] sm:$0xff]
    %v131 = vld [vmem:[%s4] sm:$0xff]
    %v132 = vld [vmem:[%s4 + $0x8] sm:$0xff]
    %v133 = vld [vmem:[%s4 + $0x10] sm:$0xff]
    %v134 = vld [vmem:[%s4 + $0x18] sm:$0xff]
    %v135 = vld [vmem:[%s4 + $0x20] sm:$0xff]
    %v136 = vld [vmem:[%s4 + $0x28] sm:$0xff]
    %v137 = vld [vmem:[%s4 + $0x30] sm:$0xff]
    %v138 = vld [vmem:[%s4 + $0x38] sm:$0xff]
    %v139 = vld [vmem:[%s5] sm:$0x1]
    %vm140 = vcmask 261120
    %v142 = vsel %vm140, 0.0, 0
    %144 = vmatprep.subr.mxu0 0.0
    %145 = vmatpush1.msra.mxu0 %v127
    %146 = vmatprep.subr.mxu0 0.0
    %147 = vmatpush1.msra.mxu0 %v128
    %148 = vmatprep.subr.mxu0 0.0
    %149 = vmatpush1.msra.mxu0 %v129
    %150 = vmatprep.subr.mxu0 0.0
    %151 = vmatpush1.msra.mxu0 %v130
    %152 = vmatprep.subr.mxu0 0.0
    %153 = vmatpush1.msra.mxu0 0.0
    %154 = vmatprep.subr.mxu0 0.0
    %155 = vmatpush1.msra.mxu0 0.0
    %156 = vmatprep.subr.mxu0 0.0
    %157 = vmatpush1.msra.mxu0 0.0
    %158 = vmatprep.subr.mxu0 0.0
    %159 = vmatpush1.msra.mxu0 0.0
    %160 = vmatprep.subr.mxu0 0.0
    %161 = vmatpush1.msra.mxu0 0.0
    %162 = vmatprep.subr.mxu0 0.0
    %163 = vmatpush1.msra.mxu0 0.0
    %164 = vmatprep.subr.mxu0 0.0
    %165 = vmatpush1.msra.mxu0 0.0
    %166 = vmatprep.subr.mxu0 0.0
    %167 = vmatpush1.msra.mxu0 0.0
    %168 = vmatprep.subr.mxu0 0.0
    %169 = vmatpush1.msra.mxu0 0.0
    %170 = vmatprep.subr.mxu0 0.0
    %171 = vmatpush1.msra.mxu0 0.0
    %172 = vmatprep.subr.mxu0 0.0
    %173 = vmatpush1.msra.mxu0 0.0
    %174 = vmatprep.subr.mxu0 0.0
    %175 = vmatpush1.msra.mxu0 0.0
    %176 = vmatprep.subr.mxu0 0.0
    %177 = vmatpush1.msra.mxu0 0.0
    %178 = vmatprep.subr.mxu0 0.0
    %179 = vmatpush1.msra.mxu0 0.0
    %180 = vmatprep.subr.mxu0 0.0
    %181 = vmatpush1.msra.mxu0 0.0
    %182 = vmatprep.subr.mxu0 0.0
    %183 = vmatpush1.msra.mxu0 0.0
    %184 = vmatprep.subr.mxu0 0.0
    %185 = vmatpush1.msra.mxu0 0.0
    %186 = vmatprep.subr.mxu0 0.0
    %187 = vmatpush1.msra.mxu0 0.0
    %188 = vmatprep.subr.mxu0 0.0
    %189 = vmatpush1.msra.mxu0 0.0
    %190 = vmatprep.subr.mxu0 0.0
    %191 = vmatpush1.msra.mxu0 0.0
    %192 = vmatprep.subr.mxu0 0.0
    %193 = vmatpush1.msra.mxu0 0.0
    %194 = vmatprep.subr.mxu0 0.0
    %195 = vmatpush1.msra.mxu0 0.0
    %196 = vmatprep.subr.mxu0 0.0
    %197 = vmatpush1.msra.mxu0 0.0
    %198 = vmatprep.subr.mxu0 0.0
    %199 = vmatpush1.msra.mxu0 0.0
    %200 = vmatprep.subr.mxu0 0.0
    %201 = vmatpush1.msra.mxu0 0.0
    %202 = vmatprep.subr.mxu0 0.0
    %203 = vmatpush1.msra.mxu0 0.0
    %204 = vmatprep.subr.mxu0 0.0
    %205 = vmatpush1.msra.mxu0 0.0
    %206 = vmatprep.subr.mxu0 0.0
    %207 = vmatpush1.msra.mxu0 0.0
    %208 = vmatprep.mubr.f32.mxu0 0.0
    %209 = vmatmul.mubr.f32.gmra.mrb[0].mxu0 %v142
    %v210 = vpop.f32.mrb[0].mxu0
    %v211 = vadd.f32 0.0, %v210
    %v212 = vpop.f32.mrb[0].mxu0
    %213 = vdwg.mxu0
    %v214 = vadd.f32 %v119, %v211
    %v215 = vxor.u32 %v214, 2147483648
    %v216 = vmul.f32 %v215, 1.442695
    %v217 = vpow.pop %v216
    %v218 = vadd.f32 %v217, 1.0
    %v219 = vrcp.pop %v218
    %v220 = vmul.f32 1.0, %v219
    %v221 = vtanh.pop %v214
    %v222 = vmul.f32 %v220, 0.0
    %224 = vrot.lane.b32.xlu0 %v221, 32
    %v225 = vpop.permute.xlu0 %224
    %v227 = vmul.f32 %v220, %v225
    %229 = vrot.lane.b32.xlu0 %v227, 32
    %v230 = vpop.permute.xlu0 %229
    %v232 = vadd.f32 %v222, %v230
    %v233 = vtanh.pop %v232
    %235 = vrot.lane.b32.xlu0 %v233, 32
    %v236 = vpop.permute.xlu0 %235
    %v238 = vmul.f32 %v220, %v236
    %240 = vrot.lane.b32.xlu0 %v238, 64
    %v241 = vpop.permute.xlu0 %240
    %v243 = vsel %vm140, %v241, 0.0
    %v245 = vlaneseq
    %v246 = vshrl.u32 %v245, 7
    %v247 = vsub.s32 0, %v246
    %v248 = vrot.slane %v139, %v247
    %vm250 = vcmask 523264
    %v252 = vsel %vm250, %v243, 0
    %254 = vmatprep.subr.mxu0 0.0
    %255 = vmatpush1.msra.mxu0 %v131
    %256 = vmatprep.subr.mxu0 0.0
    %257 = vmatpush1.msra.mxu0 %v132
    %258 = vmatprep.subr.mxu0 0.0
    %259 = vmatpush1.msra.mxu0 %v133
    %260 = vmatprep.subr.mxu0 0.0
    %261 = vmatpush1.msra.mxu0 %v134
    %262 = vmatprep.subr.mxu0 0.0
    %263 = vmatpush1.msra.mxu0 %v135
    %264 = vmatprep.subr.mxu0 0.0
    %265 = vmatpush1.msra.mxu0 %v136
    %266 = vmatprep.subr.mxu0 0.0
    %267 = vmatpush1.msra.mxu0 %v137
    %268 = vmatprep.subr.mxu0 0.0
    %269 = vmatpush1.msra.mxu0 %v138
    %270 = vmatprep.subr.mxu0 0.0
    %271 = vmatpush1.msra.mxu0 0.0
    %272 = vmatprep.subr.mxu0 0.0
    %273 = vmatpush1.msra.mxu0 0.0
    %274 = vmatprep.subr.mxu0 0.0
    %275 = vmatpush1.msra.mxu0 0.0
    %276 = vmatprep.subr.mxu0 0.0
    %277 = vmatpush1.msra.mxu0 0.0
    %278 = vmatprep.subr.mxu0 0.0
    %279 = vmatpush1.msra.mxu0 0.0
    %280 = vmatprep.subr.mxu0 0.0
    %281 = vmatpush1.msra.mxu0 0.0
    %282 = vmatprep.subr.mxu0 0.0
    %283 = vmatpush1.msra.mxu0 0.0
    %284 = vmatprep.subr.mxu0 0.0
    %285 = vmatpush1.msra.mxu0 0.0
    %286 = vmatprep.subr.mxu0 0.0
    %287 = vmatpush1.msra.mxu0 0.0
    %288 = vmatprep.subr.mxu0 0.0
    %289 = vmatpush1.msra.mxu0 0.0
    %290 = vmatprep.subr.mxu0 0.0
    %291 = vmatpush1.msra.mxu0 0.0
    %292 = vmatprep.subr.mxu0 0.0
    %293 = vmatpush1.msra.mxu0 0.0
    %294 = vmatprep.subr.mxu0 0.0
    %295 = vmatpush1.msra.mxu0 0.0
    %296 = vmatprep.subr.mxu0 0.0
    %297 = vmatpush1.msra.mxu0 0.0
    %298 = vmatprep.subr.mxu0 0.0
    %299 = vmatpush1.msra.mxu0 0.0
    %300 = vmatprep.subr.mxu0 0.0
    %301 = vmatpush1.msra.mxu0 0.0
    %302 = vmatprep.subr.mxu0 0.0
    %303 = vmatpush1.msra.mxu0 0.0
    %304 = vmatprep.subr.mxu0 0.0
    %305 = vmatpush1.msra.mxu0 0.0
    %306 = vmatprep.subr.mxu0 0.0
    %307 = vmatpush1.msra.mxu0 0.0
    %308 = vmatprep.subr.mxu0 0.0
    %309 = vmatpush1.msra.mxu0 0.0
    %310 = vmatprep.subr.mxu0 0.0
    %311 = vmatpush1.msra.mxu0 0.0
    %312 = vmatprep.subr.mxu0 0.0
    %313 = vmatpush1.msra.mxu0 0.0
    %314 = vmatprep.subr.mxu0 0.0
    %315 = vmatpush1.msra.mxu0 0.0
    %316 = vmatprep.subr.mxu0 0.0
    %317 = vmatpush1.msra.mxu0 0.0
    %318 = vmatprep.mubr.f32.mxu0 0.0
    %319 = vmatmul.mubr.f32.gmra.mrb[0].mxu0 %v252
    %v320 = vpop.f32.mrb[0].mxu0
    %v321 = vadd.f32 %v248, %v320
    %v322 = vpop.f32.mrb[0].mxu0
    %323 = vdwg.mxu0
    %v324 = vxor.u32 %v321, 2147483648
    %v325 = vmul.f32 %v324, 1.442695
    %v326 = vpow.pop %v325
    %v327 = vadd.f32 %v326, 1.0
    %v328 = vrcp.pop %v327
    %v329 = vmul.f32 1.0, %v328
    %v330 = vtanh.pop %v321
    %v331 = vmul.f32 %v329, 0.0
    %333 = vrot.lane.b32.xlu0 %v330, 32
    %v334 = vpop.permute.xlu0 %333
    %v336 = vmul.f32 %v329, %v334
    %338 = vrot.lane.b32.xlu0 %v336, 32
    %v339 = vpop.permute.xlu0 %338
    %v341 = vadd.f32 %v331, %v339
    %v342 = vtanh.pop %v341
    %344 = vrot.lane.b32.xlu0 %v342, 32
    %v345 = vpop.permute.xlu0 %344
    %v347 = vmul.f32 %v329, %v345
    %v348 = vsel %vm140, %v241, 0
    %350 = vmatprep.subr.mxu0 0.0
    %351 = vmatpush1.msra.mxu0 %v127
    %352 = vmatprep.subr.mxu0 0.0
    %353 = vmatpush1.msra.mxu0 %v128
    %354 = vmatprep.subr.mxu0 0.0
    %355 = vmatpush1.msra.mxu0 %v129
    %356 = vmatprep.subr.mxu0 0.0
    %357 = vmatpush1.msra.mxu0 %v130
    %358 = vmatprep.subr.mxu0 0.0
    %359 = vmatpush1.msra.mxu0 0.0
    %360 = vmatprep.subr.mxu0 0.0
    %361 = vmatpush1.msra.mxu0 0.0
    %362 = vmatprep.subr.mxu0 0.0
    %363 = vmatpush1.msra.mxu0 0.0
    %364 = vmatprep.subr.mxu0 0.0
    %365 = vmatpush1.msra.mxu0 0.0
    %366 = vmatprep.subr.mxu0 0.0
    %367 = vmatpush1.msra.mxu0 0.0
    %368 = vmatprep.subr.mxu0 0.0
    %369 = vmatpush1.msra.mxu0 0.0
    %370 = vmatprep.subr.mxu0 0.0
    %371 = vmatpush1.msra.mxu0 0.0
    %372 = vmatprep.subr.mxu0 0.0
    %373 = vmatpush1.msra.mxu0 0.0
    %374 = vmatprep.subr.mxu0 0.0
    %375 = vmatpush1.msra.mxu0 0.0
    %376 = vmatprep.subr.mxu0 0.0
    %377 = vmatpush1.msra.mxu0 0.0
    %378 = vmatprep.subr.mxu0 0.0
    %379 = vmatpush1.msra.mxu0 0.0
    %380 = vmatprep.subr.mxu0 0.0
    %381 = vmatpush1.msra.mxu0 0.0
    %382 = vmatprep.subr.mxu0 0.0
    %383 = vmatpush1.msra.mxu0 0.0
    %384 = vmatprep.subr.mxu0 0.0
    %385 = vmatpush1.msra.mxu0 0.0
    %386 = vmatprep.subr.mxu0 0.0
    %387 = vmatpush1.msra.mxu0 0.0
    %388 = vmatprep.subr.mxu0 0.0
    %389 = vmatpush1.msra.mxu0 0.0
    %390 = vmatprep.subr.mxu0 0.0
    %391 = vmatpush1.msra.mxu0 0.0
    %392 = vmatprep.subr.mxu0 0.0
    %393 = vmatpush1.msra.mxu0 0.0
    %394 = vmatprep.subr.mxu0 0.0
    %395 = vmatpush1.msra.mxu0 0.0
    %396 = vmatprep.subr.mxu0 0.0
    %397 = vmatpush1.msra.mxu0 0.0
    %398 = vmatprep.subr.mxu0 0.0
    %399 = vmatpush1.msra.mxu0 0.0
    %400 = vmatprep.subr.mxu0 0.0
    %401 = vmatpush1.msra.mxu0 0.0
    %402 = vmatprep.subr.mxu0 0.0
    %403 = vmatpush1.msra.mxu0 0.0
    %404 = vmatprep.subr.mxu0 0.0
    %405 = vmatpush1.msra.mxu0 0.0
    %406 = vmatprep.subr.mxu0 0.0
    %407 = vmatpush1.msra.mxu0 0.0
    %408 = vmatprep.subr.mxu0 0.0
    %409 = vmatpush1.msra.mxu0 0.0
    %410 = vmatprep.subr.mxu0 0.0
    %411 = vmatpush1.msra.mxu0 0.0
    %412 = vmatprep.subr.mxu0 0.0
    %413 = vmatpush1.msra.mxu0 0.0
    %414 = vmatprep.mubr.f32.mxu0 0.0
    %415 = vmatmul.mubr.f32.gmra.mrb[0].mxu0 %v348
    %v416 = vpop.f32.mrb[0].mxu0
    %v417 = vadd.f32 0.0, %v416
    %v418 = vpop.f32.mrb[0].mxu0
    %419 = vdwg.mxu0
    %v421 = vrot.slane %v417, 6
    %v423 = vadd.f32 %v119, %v421
    %v424 = vxor.u32 %v423, 2147483648
    %v425 = vmul.f32 %v424, 1.442695
    %v426 = vpow.pop %v425
    %v427 = vadd.f32 %v426, 1.0
    %v428 = vrcp.pop %v427
    %v429 = vmul.f32 1.0, %v428
    %v430 = vtanh.pop %v423
    %v432 = vrot.slane %v232, 6
    %v434 = vmul.f32 %v429, %v432
    %436 = vrot.lane.b32.xlu0 %v430, 32
    %v437 = vpop.permute.xlu0 %436
    %v439 = vmul.f32 %v429, %v437
    %441 = vrot.lane.b32.xlu0 %v439, 32
    %v442 = vpop.permute.xlu0 %441
    %v444 = vadd.f32 %v434, %v442
    %v445 = vtanh.pop %v444
    %447 = vrot.lane.b32.xlu0 %v445, 32
    %v448 = vpop.permute.xlu0 %447
    %v450 = vmul.f32 %v429, %v448
    %452 = vrot.lane.b32.xlu0 %v450, 64
    %v453 = vpop.permute.xlu0 %452
    %v456 = vrot.slane %v347, 6
    %457 = vrot.lane.b32.xlu0 %v456, 96
    %v458 = vpop.permute.xlu0 %457
    %v460 = vsel %vm140, %v453, %v458
    %v462 = vrot.slane %v460, 2
    %v463 = vsel %vm250, %v462, 0
    %465 = vmatprep.subr.mxu0 0.0
    %466 = vmatpush1.msra.mxu0 %v131
    %467 = vmatprep.subr.mxu0 0.0
    %468 = vmatpush1.msra.mxu0 %v132
    %469 = vmatprep.subr.mxu0 0.0
    %470 = vmatpush1.msra.mxu0 %v133
    %471 = vmatprep.subr.mxu0 0.0
    %472 = vmatpush1.msra.mxu0 %v134
    %473 = vmatprep.subr.mxu0 0.0
    %474 = vmatpush1.msra.mxu0 %v135
    %475 = vmatprep.subr.mxu0 0.0
    %476 = vmatpush1.msra.mxu0 %v136
    %477 = vmatprep.subr.mxu0 0.0
    %478 = vmatpush1.msra.mxu0 %v137
    %479 = vmatprep.subr.mxu0 0.0
    %480 = vmatpush1.msra.mxu0 %v138
    %481 = vmatprep.subr.mxu0 0.0
    %482 = vmatpush1.msra.mxu0 0.0
    %483 = vmatprep.subr.mxu0 0.0
    %484 = vmatpush1.msra.mxu0 0.0
    %485 = vmatprep.subr.mxu0 0.0
    %486 = vmatpush1.msra.mxu0 0.0
    %487 = vmatprep.subr.mxu0 0.0
    %488 = vmatpush1.msra.mxu0 0.0
    %489 = vmatprep.subr.mxu0 0.0
    %490 = vmatpush1.msra.mxu0 0.0
    %491 = vmatprep.subr.mxu0 0.0
    %492 = vmatpush1.msra.mxu0 0.0
    %493 = vmatprep.subr.mxu0 0.0
    %494 = vmatpush1.msra.mxu0 0.0
    %495 = vmatprep.subr.mxu0 0.0
    %496 = vmatpush1.msra.mxu0 0.0
    %497 = vmatprep.subr.mxu0 0.0
    %498 = vmatpush1.msra.mxu0 0.0
    %499 = vmatprep.subr.mxu0 0.0
    %500 = vmatpush1.msra.mxu0 0.0
    %501 = vmatprep.subr.mxu0 0.0
    %502 = vmatpush1.msra.mxu0 0.0
    %503 = vmatprep.subr.mxu0 0.0
    %504 = vmatpush1.msra.mxu0 0.0
    %505 = vmatprep.subr.mxu0 0.0
    %506 = vmatpush1.msra.mxu0 0.0
    %507 = vmatprep.subr.mxu0 0.0
    %508 = vmatpush1.msra.mxu0 0.0
    %509 = vmatprep.subr.mxu0 0.0
    %510 = vmatpush1.msra.mxu0 0.0
    %511 = vmatprep.subr.mxu0 0.0
    %512 = vmatpush1.msra.mxu0 0.0
    %513 = vmatprep.subr.mxu0 0.0
    %514 = vmatpush1.msra.mxu0 0.0
    %515 = vmatprep.subr.mxu0 0.0
    %516 = vmatpush1.msra.mxu0 0.0
    %517 = vmatprep.subr.mxu0 0.0
    %518 = vmatpush1.msra.mxu0 0.0
    %519 = vmatprep.subr.mxu0 0.0
    %520 = vmatpush1.msra.mxu0 0.0
    %521 = vmatprep.subr.mxu0 0.0
    %522 = vmatpush1.msra.mxu0 0.0
    %523 = vmatprep.subr.mxu0 0.0
    %524 = vmatpush1.msra.mxu0 0.0
    %525 = vmatprep.subr.mxu0 0.0
    %526 = vmatpush1.msra.mxu0 0.0
    %527 = vmatprep.subr.mxu0 0.0
    %528 = vmatpush1.msra.mxu0 0.0
    %529 = vmatprep.mubr.f32.mxu0 0.0
    %530 = vmatmul.mubr.f32.gmra.mrb[0].mxu0 %v463
    %v531 = vpop.f32.mrb[0].mxu0
    %v532 = vadd.f32 %v248, %v531
    %v533 = vpop.f32.mrb[0].mxu0
    %534 = vdwg.mxu0
    %v535 = vxor.u32 %v532, 2147483648
    %v536 = vmul.f32 %v535, 1.442695
    %v537 = vpow.pop %v536
    %v538 = vadd.f32 %v537, 1.0
    %v539 = vrcp.pop %v538
    %v540 = vmul.f32 1.0, %v539
    %v541 = vtanh.pop %v532
    %v542 = vmul.f32 %v540, %v341
    %544 = vrot.lane.b32.xlu0 %v541, 32
    %v545 = vpop.permute.xlu0 %544
    %v547 = vmul.f32 %v540, %v545
    %549 = vrot.lane.b32.xlu0 %v547, 32
    %v550 = vpop.permute.xlu0 %549
    %v552 = vadd.f32 %v542, %v550
    %v553 = vtanh.pop %v552
    %555 = vrot.lane.b32.xlu0 %v553, 32
    %v556 = vpop.permute.xlu0 %555
    %v558 = vmul.f32 %v540, %v556
    %v559 = vrot.slane %v450, 2
    %560 = vrot.lane.b32.xlu0 %v559, 64
    %v561 = vpop.permute.xlu0 %560
    %v562 = vsel %vm140, %v561, 0
    %564 = vmatprep.subr.mxu0 0.0
    %565 = vmatpush1.msra.mxu0 %v127
    %566 = vmatprep.subr.mxu0 0.0
    %567 = vmatpush1.msra.mxu0 %v128
    %568 = vmatprep.subr.mxu0 0.0
    %569 = vmatpush1.msra.mxu0 %v129
    %570 = vmatprep.subr.mxu0 0.0
    %571 = vmatpush1.msra.mxu0 %v130
    %572 = vmatprep.subr.mxu0 0.0
    %573 = vmatpush1.msra.mxu0 0.0
    %574 = vmatprep.subr.mxu0 0.0
    %575 = vmatpush1.msra.mxu0 0.0
    %576 = vmatprep.subr.mxu0 0.0
    %577 = vmatpush1.msra.mxu0 0.0
    %578 = vmatprep.subr.mxu0 0.0
    %579 = vmatpush1.msra.mxu0 0.0
    %580 = vmatprep.subr.mxu0 0.0
    %581 = vmatpush1.msra.mxu0 0.0
    %582 = vmatprep.subr.mxu0 0.0
    %583 = vmatpush1.msra.mxu0 0.0
    %584 = vmatprep.subr.mxu0 0.0
    %585 = vmatpush1.msra.mxu0 0.0
    %586 = vmatprep.subr.mxu0 0.0
    %587 = vmatpush1.msra.mxu0 0.0
    %588 = vmatprep.subr.mxu0 0.0
    %589 = vmatpush1.msra.mxu0 0.0
    %590 = vmatprep.subr.mxu0 0.0
    %591 = vmatpush1.msra.mxu0 0.0
    %592 = vmatprep.subr.mxu0 0.0
    %593 = vmatpush1.msra.mxu0 0.0
    %594 = vmatprep.subr.mxu0 0.0
    %595 = vmatpush1.msra.mxu0 0.0
    %596 = vmatprep.subr.mxu0 0.0
    %597 = vmatpush1.msra.mxu0 0.0
    %598 = vmatprep.subr.mxu0 0.0
    %599 = vmatpush1.msra.mxu0 0.0
    %600 = vmatprep.subr.mxu0 0.0
    %601 = vmatpush1.msra.mxu0 0.0
    %602 = vmatprep.subr.mxu0 0.0
    %603 = vmatpush1.msra.mxu0 0.0
    %604 = vmatprep.subr.mxu0 0.0
    %605 = vmatpush1.msra.mxu0 0.0
    %606 = vmatprep.subr.mxu0 0.0
    %607 = vmatpush1.msra.mxu0 0.0
    %608 = vmatprep.subr.mxu0 0.0
    %609 = vmatpush1.msra.mxu0 0.0
    %610 = vmatprep.subr.mxu0 0.0
    %611 = vmatpush1.msra.mxu0 0.0
    %612 = vmatprep.subr.mxu0 0.0
    %613 = vmatpush1.msra.mxu0 0.0
    %614 = vmatprep.subr.mxu0 0.0
    %615 = vmatpush1.msra.mxu0 0.0
    %616 = vmatprep.subr.mxu0 0.0
    %617 = vmatpush1.msra.mxu0 0.0
    %618 = vmatprep.subr.mxu0 0.0
    %619 = vmatpush1.msra.mxu0 0.0
    %620 = vmatprep.subr.mxu0 0.0
    %621 = vmatpush1.msra.mxu0 0.0
    %622 = vmatprep.subr.mxu0 0.0
    %623 = vmatpush1.msra.mxu0 0.0
    %624 = vmatprep.subr.mxu0 0.0
    %625 = vmatpush1.msra.mxu0 0.0
    %626 = vmatprep.subr.mxu0 0.0
    %627 = vmatpush1.msra.mxu0 0.0
    %628 = vmatprep.mubr.f32.mxu0 0.0
    %629 = vmatmul.mubr.f32.gmra.mrb[0].mxu0 %v562
    %v630 = vpop.f32.mrb[0].mxu0
    %v631 = vadd.f32 0.0, %v630
    %v632 = vpop.f32.mrb[0].mxu0
    %633 = vdwg.mxu0
    %v635 = vrot.slane %v631, 4
    %v637 = vadd.f32 %v119, %v635
    %v638 = vxor.u32 %v637, 2147483648
    %v639 = vmul.f32 %v638, 1.442695
    %v640 = vpow.pop %v639
    %v641 = vadd.f32 %v640, 1.0
    %v642 = vrcp.pop %v641
    %v643 = vmul.f32 1.0, %v642
    %v644 = vtanh.pop %v637
    %v646 = vrot.slane %v444, 6
    %v648 = vmul.f32 %v643, %v646
    %650 = vrot.lane.b32.xlu0 %v644, 32
    %v651 = vpop.permute.xlu0 %650
    %v653 = vmul.f32 %v643, %v651
    %655 = vrot.lane.b32.xlu0 %v653, 32
    %v656 = vpop.permute.xlu0 %655
    %v658 = vadd.f32 %v648, %v656
    %v659 = vtanh.pop %v658
    %661 = vrot.lane.b32.xlu0 %v659, 32
    %v662 = vpop.permute.xlu0 %661
    %v664 = vmul.f32 %v643, %v662
    %666 = vrot.lane.b32.xlu0 %v664, 64
    %v667 = vpop.permute.xlu0 %666
    %v670 = vrot.slane %v558, 4
    %671 = vrot.lane.b32.xlu0 %v670, 96
    %v672 = vpop.permute.xlu0 %671
    %v674 = vsel %vm140, %v667, %v672
    %v676 = vrot.slane %v674, 4
    %v677 = vsel %vm250, %v676, 0
    %679 = vmatprep.subr.mxu0 0.0
    %680 = vmatpush1.msra.mxu0 %v131
    %681 = vmatprep.subr.mxu0 0.0
    %682 = vmatpush1.msra.mxu0 %v132
    %683 = vmatprep.subr.mxu0 0.0
    %684 = vmatpush1.msra.mxu0 %v133
    %685 = vmatprep.subr.mxu0 0.0
    %686 = vmatpush1.msra.mxu0 %v134
    %687 = vmatprep.subr.mxu0 0.0
    %688 = vmatpush1.msra.mxu0 %v135
    %689 = vmatprep.subr.mxu0 0.0
    %690 = vmatpush1.msra.mxu0 %v136
    %691 = vmatprep.subr.mxu0 0.0
    %692 = vmatpush1.msra.mxu0 %v137
    %693 = vmatprep.subr.mxu0 0.0
    %694 = vmatpush1.msra.mxu0 %v138
    %695 = vmatprep.subr.mxu0 0.0
    %696 = vmatpush1.msra.mxu0 0.0
    %697 = vmatprep.subr.mxu0 0.0
    %698 = vmatpush1.msra.mxu0 0.0
    %699 = vmatprep.subr.mxu0 0.0
    %700 = vmatpush1.msra.mxu0 0.0
    %701 = vmatprep.subr.mxu0 0.0
    %702 = vmatpush1.msra.mxu0 0.0
    %703 = vmatprep.subr.mxu0 0.0
    %704 = vmatpush1.msra.mxu0 0.0
    %705 = vmatprep.subr.mxu0 0.0
    %706 = vmatpush1.msra.mxu0 0.0
    %707 = vmatprep.subr.mxu0 0.0
    %708 = vmatpush1.msra.mxu0 0.0
    %709 = vmatprep.subr.mxu0 0.0
    %710 = vmatpush1.msra.mxu0 0.0
    %711 = vmatprep.subr.mxu0 0.0
    %712 = vmatpush1.msra.mxu0 0.0
    %713 = vmatprep.subr.mxu0 0.0
    %714 = vmatpush1.msra.mxu0 0.0
    %715 = vmatprep.subr.mxu0 0.0
    %716 = vmatpush1.msra.mxu0 0.0
    %717 = vmatprep.subr.mxu0 0.0
    %718 = vmatpush1.msra.mxu0 0.0
    %719 = vmatprep.subr.mxu0 0.0
    %720 = vmatpush1.msra.mxu0 0.0
    %721 = vmatprep.subr.mxu0 0.0
    %722 = vmatpush1.msra.mxu0 0.0
    %723 = vmatprep.subr.mxu0 0.0
    %724 = vmatpush1.msra.mxu0 0.0
    %725 = vmatprep.subr.mxu0 0.0
    %726 = vmatpush1.msra.mxu0 0.0
    %727 = vmatprep.subr.mxu0 0.0
    %728 = vmatpush1.msra.mxu0 0.0
    %729 = vmatprep.subr.mxu0 0.0
    %730 = vmatpush1.msra.mxu0 0.0
    %731 = vmatprep.subr.mxu0 0.0
    %732 = vmatpush1.msra.mxu0 0.0
    %733 = vmatprep.subr.mxu0 0.0
    %734 = vmatpush1.msra.mxu0 0.0
    %735 = vmatprep.subr.mxu0 0.0
    %736 = vmatpush1.msra.mxu0 0.0
    %737 = vmatprep.subr.mxu0 0.0
    %738 = vmatpush1.msra.mxu0 0.0
    %739 = vmatprep.subr.mxu0 0.0
    %740 = vmatpush1.msra.mxu0 0.0
    %741 = vmatprep.subr.mxu0 0.0
    %742 = vmatpush1.msra.mxu0 0.0
    %743 = vmatprep.mubr.f32.mxu0 0.0
    %744 = vmatmul.mubr.f32.gmra.mrb[0].mxu0 %v677
    %v745 = vpop.f32.mrb[0].mxu0
    %v746 = vadd.f32 %v248, %v745
    %v747 = vpop.f32.mrb[0].mxu0
    %748 = vdwg.mxu0
    %v749 = vxor.u32 %v746, 2147483648
    %v750 = vmul.f32 %v749, 1.442695
    %v751 = vpow.pop %v750
    %v752 = vadd.f32 %v751, 1.0
    %v753 = vrcp.pop %v752
    %v754 = vmul.f32 1.0, %v753
    %v755 = vtanh.pop %v746
    %v756 = vmul.f32 %v754, %v552
    %758 = vrot.lane.b32.xlu0 %v755, 32
    %v759 = vpop.permute.xlu0 %758
    %v761 = vmul.f32 %v754, %v759
    %763 = vrot.lane.b32.xlu0 %v761, 32
    %v764 = vpop.permute.xlu0 %763
    %v766 = vadd.f32 %v756, %v764
    %v767 = vtanh.pop %v766
    %769 = vrot.lane.b32.xlu0 %v767, 32
    %v770 = vpop.permute.xlu0 %769
    %v772 = vmul.f32 %v754, %v770
    %v773 = vrot.slane %v664, 4
    %774 = vrot.lane.b32.xlu0 %v773, 64
    %v775 = vpop.permute.xlu0 %774
    %v776 = vsel %vm140, %v775, 0
    %778 = vmatprep.subr.mxu0 0.0
    %779 = vmatpush1.msra.mxu0 %v127
    %780 = vmatprep.subr.mxu0 0.0
    %781 = vmatpush1.msra.mxu0 %v128
    %782 = vmatprep.subr.mxu0 0.0
    %783 = vmatpush1.msra.mxu0 %v129
    %784 = vmatprep.subr.mxu0 0.0
    %785 = vmatpush1.msra.mxu0 %v130
    %786 = vmatprep.subr.mxu0 0.0
    %787 = vmatpush1.msra.mxu0 0.0
    %788 = vmatprep.subr.mxu0 0.0
    %789 = vmatpush1.msra.mxu0 0.0
    %790 = vmatprep.subr.mxu0 0.0
    %791 = vmatpush1.msra.mxu0 0.0
    %792 = vmatprep.subr.mxu0 0.0
    %793 = vmatpush1.msra.mxu0 0.0
    %794 = vmatprep.subr.mxu0 0.0
    %795 = vmatpush1.msra.mxu0 0.0
    %796 = vmatprep.subr.mxu0 0.0
    %797 = vmatpush1.msra.mxu0 0.0
    %798 = vmatprep.subr.mxu0 0.0
    %799 = vmatpush1.msra.mxu0 0.0
    %800 = vmatprep.subr.mxu0 0.0
    %801 = vmatpush1.msra.mxu0 0.0
    %802 = vmatprep.subr.mxu0 0.0
    %803 = vmatpush1.msra.mxu0 0.0
    %804 = vmatprep.subr.mxu0 0.0
    %805 = vmatpush1.msra.mxu0 0.0
    %806 = vmatprep.subr.mxu0 0.0
    %807 = vmatpush1.msra.mxu0 0.0
    %808 = vmatprep.subr.mxu0 0.0
    %809 = vmatpush1.msra.mxu0 0.0
    %810 = vmatprep.subr.mxu0 0.0
    %811 = vmatpush1.msra.mxu0 0.0
    %812 = vmatprep.subr.mxu0 0.0
    %813 = vmatpush1.msra.mxu0 0.0
    %814 = vmatprep.subr.mxu0 0.0
    %815 = vmatpush1.msra.mxu0 0.0
    %816 = vmatprep.subr.mxu0 0.0
    %817 = vmatpush1.msra.mxu0 0.0
    %818 = vmatprep.subr.mxu0 0.0
    %819 = vmatpush1.msra.mxu0 0.0
    %820 = vmatprep.subr.mxu0 0.0
    %821 = vmatpush1.msra.mxu0 0.0
    %822 = vmatprep.subr.mxu0 0.0
    %823 = vmatpush1.msra.mxu0 0.0
    %824 = vmatprep.subr.mxu0 0.0
    %825 = vmatpush1.msra.mxu0 0.0
    %826 = vmatprep.subr.mxu0 0.0
    %827 = vmatpush1.msra.mxu0 0.0
    %828 = vmatprep.subr.mxu0 0.0
    %829 = vmatpush1.msra.mxu0 0.0
    %830 = vmatprep.subr.mxu0 0.0
    %831 = vmatpush1.msra.mxu0 0.0
    %832 = vmatprep.subr.mxu0 0.0
    %833 = vmatpush1.msra.mxu0 0.0
    %834 = vmatprep.subr.mxu0 0.0
    %835 = vmatpush1.msra.mxu0 0.0
    %836 = vmatprep.subr.mxu0 0.0
    %837 = vmatpush1.msra.mxu0 0.0
    %838 = vmatprep.subr.mxu0 0.0
    %839 = vmatpush1.msra.mxu0 0.0
    %840 = vmatprep.subr.mxu0 0.0
    %841 = vmatpush1.msra.mxu0 0.0
    %842 = vmatprep.mubr.f32.mxu0 0.0
    %843 = vmatmul.mubr.f32.gmra.mrb[0].mxu0 %v776
    %v844 = vpop.f32.mrb[0].mxu0
    %v845 = vadd.f32 0.0, %v844
    %v846 = vpop.f32.mrb[0].mxu0
    %847 = vdwg.mxu0
    %v849 = vrot.slane %v845, 2
    %v851 = vadd.f32 %v119, %v849
    %v852 = vxor.u32 %v851, 2147483648
    %v853 = vmul.f32 %v852, 1.442695
    %v854 = vpow.pop %v853
    %v855 = vadd.f32 %v854, 1.0
    %v856 = vrcp.pop %v855
    %v857 = vmul.f32 1.0, %v856
    %v858 = vtanh.pop %v851
    %v860 = vrot.slane %v658, 6
    %v862 = vmul.f32 %v857, %v860
    %864 = vrot.lane.b32.xlu0 %v858, 32
    %v865 = vpop.permute.xlu0 %864
    %v867 = vmul.f32 %v857, %v865
    %869 = vrot.lane.b32.xlu0 %v867, 32
    %v870 = vpop.permute.xlu0 %869
    %v872 = vadd.f32 %v862, %v870
    %v873 = vtanh.pop %v872
    %875 = vrot.lane.b32.xlu0 %v873, 32
    %v876 = vpop.permute.xlu0 %875
    %v878 = vmul.f32 %v857, %v876
    %880 = vrot.lane.b32.xlu0 %v878, 64
    %v881 = vpop.permute.xlu0 %880
    %v884 = vrot.slane %v772, 2
    %885 = vrot.lane.b32.xlu0 %v884, 96
    %v886 = vpop.permute.xlu0 %885
    %v888 = vsel %vm140, %v881, %v886
    %v890 = vrot.slane %v888, 6
    %v891 = vsel %vm250, %v890, 0
    %893 = vmatprep.subr.mxu0 0.0
    %894 = vmatpush1.msra.mxu0 %v131
    %895 = vmatprep.subr.mxu0 0.0
    %896 = vmatpush1.msra.mxu0 %v132
    %897 = vmatprep.subr.mxu0 0.0
    %898 = vmatpush1.msra.mxu0 %v133
    %899 = vmatprep.subr.mxu0 0.0
    %900 = vmatpush1.msra.mxu0 %v134
    %901 = vmatprep.subr.mxu0 0.0
    %902 = vmatpush1.msra.mxu0 %v135
    %903 = vmatprep.subr.mxu0 0.0
    %904 = vmatpush1.msra.mxu0 %v136
    %905 = vmatprep.subr.mxu0 0.0
    %906 = vmatpush1.msra.mxu0 %v137
    %907 = vmatprep.subr.mxu0 0.0
    %908 = vmatpush1.msra.mxu0 %v138
    %909 = vmatprep.subr.mxu0 0.0
    %910 = vmatpush1.msra.mxu0 0.0
    %911 = vmatprep.subr.mxu0 0.0
    %912 = vmatpush1.msra.mxu0 0.0
    %913 = vmatprep.subr.mxu0 0.0
    %914 = vmatpush1.msra.mxu0 0.0
    %915 = vmatprep.subr.mxu0 0.0
    %916 = vmatpush1.msra.mxu0 0.0
    %917 = vmatprep.subr.mxu0 0.0
    %918 = vmatpush1.msra.mxu0 0.0
    %919 = vmatprep.subr.mxu0 0.0
    %920 = vmatpush1.msra.mxu0 0.0
    %921 = vmatprep.subr.mxu0 0.0
    %922 = vmatpush1.msra.mxu0 0.0
    %923 = vmatprep.subr.mxu0 0.0
    %924 = vmatpush1.msra.mxu0 0.0
    %925 = vmatprep.subr.mxu0 0.0
    %926 = vmatpush1.msra.mxu0 0.0
    %927 = vmatprep.subr.mxu0 0.0
    %928 = vmatpush1.msra.mxu0 0.0
    %929 = vmatprep.subr.mxu0 0.0
    %930 = vmatpush1.msra.mxu0 0.0
    %931 = vmatprep.subr.mxu0 0.0
    %932 = vmatpush1.msra.mxu0 0.0
    %933 = vmatprep.subr.mxu0 0.0
    %934 = vmatpush1.msra.mxu0 0.0
    %935 = vmatprep.subr.mxu0 0.0
    %936 = vmatpush1.msra.mxu0 0.0
    %937 = vmatprep.subr.mxu0 0.0
    %938 = vmatpush1.msra.mxu0 0.0
    %939 = vmatprep.subr.mxu0 0.0
    %940 = vmatpush1.msra.mxu0 0.0
    %941 = vmatprep.subr.mxu0 0.0
    %942 = vmatpush1.msra.mxu0 0.0
    %943 = vmatprep.subr.mxu0 0.0
    %944 = vmatpush1.msra.mxu0 0.0
    %945 = vmatprep.subr.mxu0 0.0
    %946 = vmatpush1.msra.mxu0 0.0
    %947 = vmatprep.subr.mxu0 0.0
    %948 = vmatpush1.msra.mxu0 0.0
    %949 = vmatprep.subr.mxu0 0.0
    %950 = vmatpush1.msra.mxu0 0.0
    %951 = vmatprep.subr.mxu0 0.0
    %952 = vmatpush1.msra.mxu0 0.0
    %953 = vmatprep.subr.mxu0 0.0
    %954 = vmatpush1.msra.mxu0 0.0
    %955 = vmatprep.subr.mxu0 0.0
    %956 = vmatpush1.msra.mxu0 0.0
    %957 = vmatprep.mubr.f32.mxu0 0.0
    %958 = vmatmul.mubr.f32.gmra.mrb[0].mxu0 %v891
    %v959 = vpop.f32.mrb[0].mxu0
    %v960 = vadd.f32 %v248, %v959
    %v961 = vpop.f32.mrb[0].mxu0
    %962 = vdwg.mxu0
    %v963 = vxor.u32 %v960, 2147483648
    %v964 = vmul.f32 %v963, 1.442695
    %v965 = vpow.pop %v964
    %v966 = vadd.f32 %v965, 1.0
    %v967 = vrcp.pop %v966
    %v968 = vmul.f32 1.0, %v967
    %v969 = vtanh.pop %v960
    %v970 = vmul.f32 %v968, %v766
    %972 = vrot.lane.b32.xlu0 %v969, 32
    %v973 = vpop.permute.xlu0 %972
    %v975 = vmul.f32 %v968, %v973
    %977 = vrot.lane.b32.xlu0 %v975, 32
    %v978 = vpop.permute.xlu0 %977
    %v980 = vadd.f32 %v970, %v978
    %v981 = vtanh.pop %v980
    %983 = vrot.lane.b32.xlu0 %v981, 32
    %v984 = vpop.permute.xlu0 %983
    %v986 = vmul.f32 %v968, %v984
    %v987 = vrot.slane %v878, 6
    %988 = vrot.lane.b32.xlu0 %v987, 64
    %v989 = vpop.permute.xlu0 %988
    %v990 = vsel %vm140, %v989, 0
    %992 = vmatprep.subr.mxu0 0.0
    %993 = vmatpush1.msra.mxu0 %v127
    %994 = vmatprep.subr.mxu0 0.0
    %995 = vmatpush1.msra.mxu0 %v128
    %996 = vmatprep.subr.mxu0 0.0
    %997 = vmatpush1.msra.mxu0 %v129
    %998 = vmatprep.subr.mxu0 0.0
    %999 = vmatpush1.msra.mxu0 %v130
    %1000 = vmatprep.subr.mxu0 0.0
    %1001 = vmatpush1.msra.mxu0 0.0
    %1002 = vmatprep.subr.mxu0 0.0
    %1003 = vmatpush1.msra.mxu0 0.0
    %1004 = vmatprep.subr.mxu0 0.0
    %1005 = vmatpush1.msra.mxu0 0.0
    %1006 = vmatprep.subr.mxu0 0.0
    %1007 = vmatpush1.msra.mxu0 0.0
    %1008 = vmatprep.subr.mxu0 0.0
    %1009 = vmatpush1.msra.mxu0 0.0
    %1010 = vmatprep.subr.mxu0 0.0
    %1011 = vmatpush1.msra.mxu0 0.0
    %1012 = vmatprep.subr.mxu0 0.0
    %1013 = vmatpush1.msra.mxu0 0.0
    %1014 = vmatprep.subr.mxu0 0.0
    %1015 = vmatpush1.msra.mxu0 0.0
    %1016 = vmatprep.subr.mxu0 0.0
    %1017 = vmatpush1.msra.mxu0 0.0
    %1018 = vmatprep.subr.mxu0 0.0
    %1019 = vmatpush1.msra.mxu0 0.0
    %1020 = vmatprep.subr.mxu0 0.0
    %1021 = vmatpush1.msra.mxu0 0.0
    %1022 = vmatprep.subr.mxu0 0.0
    %1023 = vmatpush1.msra.mxu0 0.0
    %1024 = vmatprep.subr.mxu0 0.0
    %1025 = vmatpush1.msra.mxu0 0.0
    %1026 = vmatprep.subr.mxu0 0.0
    %1027 = vmatpush1.msra.mxu0 0.0
    %1028 = vmatprep.subr.mxu0 0.0
    %1029 = vmatpush1.msra.mxu0 0.0
    %1030 = vmatprep.subr.mxu0 0.0
    %1031 = vmatpush1.msra.mxu0 0.0
    %1032 = vmatprep.subr.mxu0 0.0
    %1033 = vmatpush1.msra.mxu0 0.0
    %1034 = vmatprep.subr.mxu0 0.0
    %1035 = vmatpush1.msra.mxu0 0.0
    %1036 = vmatprep.subr.mxu0 0.0
    %1037 = vmatpush1.msra.mxu0 0.0
    %1038 = vmatprep.subr.mxu0 0.0
    %1039 = vmatpush1.msra.mxu0 0.0
    %1040 = vmatprep.subr.mxu0 0.0
    %1041 = vmatpush1.msra.mxu0 0.0
    %1042 = vmatprep.subr.mxu0 0.0
    %1043 = vmatpush1.msra.mxu0 0.0
    %1044 = vmatprep.subr.mxu0 0.0
    %1045 = vmatpush1.msra.mxu0 0.0
    %1046 = vmatprep.subr.mxu0 0.0
    %1047 = vmatpush1.msra.mxu0 0.0
    %1048 = vmatprep.subr.mxu0 0.0
    %1049 = vmatpush1.msra.mxu0 0.0
    %1050 = vmatprep.subr.mxu0 0.0
    %1051 = vmatpush1.msra.mxu0 0.0
    %1052 = vmatprep.subr.mxu0 0.0
    %1053 = vmatpush1.msra.mxu0 0.0
    %1054 = vmatprep.subr.mxu0 0.0
    %1055 = vmatpush1.msra.mxu0 0.0
    %1056 = vmatprep.mubr.f32.mxu0 0.0
    %1057 = vmatmul.mubr.f32.gmra.mrb[0].mxu0 %v990
    %v1058 = vpop.f32.mrb[0].mxu0
    %v1059 = vadd.f32 0.0, %v1058
    %v1060 = vpop.f32.mrb[0].mxu0
    %1061 = vdwg.mxu0
    %v1062 = vadd.f32 %v124, %v1059
    %v1063 = vxor.u32 %v1062, 2147483648
    %v1064 = vmul.f32 %v1063, 1.442695
    %v1065 = vpow.pop %v1064
    %v1066 = vadd.f32 %v1065, 1.0
    %v1067 = vrcp.pop %v1066
    %v1068 = vmul.f32 1.0, %v1067
    %v1069 = vtanh.pop %v1062
    %v1071 = vrot.slane %v872, 6
    %v1073 = vmul.f32 %v1068, %v1071
    %1075 = vrot.lane.b32.xlu0 %v1069, 32
    %v1076 = vpop.permute.xlu0 %1075
    %v1078 = vmul.f32 %v1068, %v1076
    %1080 = vrot.lane.b32.xlu0 %v1078, 32
    %v1081 = vpop.permute.xlu0 %1080
    %v1083 = vadd.f32 %v1073, %v1081
    %v1084 = vtanh.pop %v1083
    %1086 = vrot.lane.b32.xlu0 %v1084, 32
    %v1087 = vpop.permute.xlu0 %1086
    %v1089 = vmul.f32 %v1068, %v1087
    %1091 = vrot.lane.b32.xlu0 %v1089, 64
    %v1092 = vpop.permute.xlu0 %1091
    %1095 = vrot.lane.b32.xlu0 %v986, 96
    %v1096 = vpop.permute.xlu0 %1095
    %v1098 = vsel %vm140, %v1092, %v1096
    %v1100 = vsel %vm250, %v1098, 0
    %1102 = vmatprep.subr.mxu0 0.0
    %1103 = vmatpush1.msra.mxu0 %v131
    %1104 = vmatprep.subr.mxu0 0.0
    %1105 = vmatpush1.msra.mxu0 %v132
    %1106 = vmatprep.subr.mxu0 0.0
    %1107 = vmatpush1.msra.mxu0 %v133
    %1108 = vmatprep.subr.mxu0 0.0
    %1109 = vmatpush1.msra.mxu0 %v134
    %1110 = vmatprep.subr.mxu0 0.0
    %1111 = vmatpush1.msra.mxu0 %v135
    %1112 = vmatprep.subr.mxu0 0.0
    %1113 = vmatpush1.msra.mxu0 %v136
    %1114 = vmatprep.subr.mxu0 0.0
    %1115 = vmatpush1.msra.mxu0 %v137
    %1116 = vmatprep.subr.mxu0 0.0
    %1117 = vmatpush1.msra.mxu0 %v138
    %1118 = vmatprep.subr.mxu0 0.0
    %1119 = vmatpush1.msra.mxu0 0.0
    %1120 = vmatprep.subr.mxu0 0.0
    %1121 = vmatpush1.msra.mxu0 0.0
    %1122 = vmatprep.subr.mxu0 0.0
    %1123 = vmatpush1.msra.mxu0 0.0
    %1124 = vmatprep.subr.mxu0 0.0
    %1125 = vmatpush1.msra.mxu0 0.0
    %1126 = vmatprep.subr.mxu0 0.0
    %1127 = vmatpush1.msra.mxu0 0.0
    %1128 = vmatprep.subr.mxu0 0.0
    %1129 = vmatpush1.msra.mxu0 0.0
    %1130 = vmatprep.subr.mxu0 0.0
    %1131 = vmatpush1.msra.mxu0 0.0
    %1132 = vmatprep.subr.mxu0 0.0
    %1133 = vmatpush1.msra.mxu0 0.0
    %1134 = vmatprep.subr.mxu0 0.0
    %1135 = vmatpush1.msra.mxu0 0.0
    %1136 = vmatprep.subr.mxu0 0.0
    %1137 = vmatpush1.msra.mxu0 0.0
    %1138 = vmatprep.subr.mxu0 0.0
    %1139 = vmatpush1.msra.mxu0 0.0
    %1140 = vmatprep.subr.mxu0 0.0
    %1141 = vmatpush1.msra.mxu0 0.0
    %1142 = vmatprep.subr.mxu0 0.0
    %1143 = vmatpush1.msra.mxu0 0.0
    %1144 = vmatprep.subr.mxu0 0.0
    %1145 = vmatpush1.msra.mxu0 0.0
    %1146 = vmatprep.subr.mxu0 0.0
    %1147 = vmatpush1.msra.mxu0 0.0
    %1148 = vmatprep.subr.mxu0 0.0
    %1149 = vmatpush1.msra.mxu0 0.0
    %1150 = vmatprep.subr.mxu0 0.0
    %1151 = vmatpush1.msra.mxu0 0.0
    %1152 = vmatprep.subr.mxu0 0.0
    %1153 = vmatpush1.msra.mxu0 0.0
    %1154 = vmatprep.subr.mxu0 0.0
    %1155 = vmatpush1.msra.mxu0 0.0
    %1156 = vmatprep.subr.mxu0 0.0
    %1157 = vmatpush1.msra.mxu0 0.0
    %1158 = vmatprep.subr.mxu0 0.0
    %1159 = vmatpush1.msra.mxu0 0.0
    %1160 = vmatprep.subr.mxu0 0.0
    %1161 = vmatpush1.msra.mxu0 0.0
    %1162 = vmatprep.subr.mxu0 0.0
    %1163 = vmatpush1.msra.mxu0 0.0
    %1164 = vmatprep.subr.mxu0 0.0
    %1165 = vmatpush1.msra.mxu0 0.0
    %1166 = vmatprep.mubr.f32.mxu0 0.0
    %1167 = vmatmul.mubr.f32.gmra.mrb[0].mxu0 %v1100
    %v1168 = vpop.f32.mrb[0].mxu0
    %v1169 = vadd.f32 %v248, %v1168
    %v1170 = vpop.f32.mrb[0].mxu0
    %1171 = vdwg.mxu0
    %v1172 = vxor.u32 %v1169, 2147483648
    %v1173 = vmul.f32 %v1172, 1.442695
    %v1174 = vpow.pop %v1173
    %v1175 = vadd.f32 %v1174, 1.0
    %v1176 = vrcp.pop %v1175
    %v1177 = vmul.f32 1.0, %v1176
    %v1178 = vtanh.pop %v1169
    %v1179 = vmul.f32 %v1177, %v980
    %1181 = vrot.lane.b32.xlu0 %v1178, 32
    %v1182 = vpop.permute.xlu0 %1181
    %v1184 = vmul.f32 %v1177, %v1182
    %1186 = vrot.lane.b32.xlu0 %v1184, 32
    %v1187 = vpop.permute.xlu0 %1186
    %v1189 = vadd.f32 %v1179, %v1187
    %v1190 = vtanh.pop %v1189
    %1192 = vrot.lane.b32.xlu0 %v1190, 32
    %v1193 = vpop.permute.xlu0 %1192
    %v1195 = vmul.f32 %v1177, %v1193
    %v1196 = vsel %vm140, %v1092, 0
    %1198 = vmatprep.subr.mxu0 0.0
    %1199 = vmatpush1.msra.mxu0 %v127
    %1200 = vmatprep.subr.mxu0 0.0
    %1201 = vmatpush1.msra.mxu0 %v128
    %1202 = vmatprep.subr.mxu0 0.0
    %1203 = vmatpush1.msra.mxu0 %v129
    %1204 = vmatprep.subr.mxu0 0.0
    %1205 = vmatpush1.msra.mxu0 %v130
    %1206 = vmatprep.subr.mxu0 0.0
    %1207 = vmatpush1.msra.mxu0 0.0
    %1208 = vmatprep.subr.mxu0 0.0
    %1209 = vmatpush1.msra.mxu0 0.0
    %1210 = vmatprep.subr.mxu0 0.0
    %1211 = vmatpush1.msra.mxu0 0.0
    %1212 = vmatprep.subr.mxu0 0.0
    %1213 = vmatpush1.msra.mxu0 0.0
    %1214 = vmatprep.subr.mxu0 0.0
    %1215 = vmatpush1.msra.mxu0 0.0
    %1216 = vmatprep.subr.mxu0 0.0
    %1217 = vmatpush1.msra.mxu0 0.0
    %1218 = vmatprep.subr.mxu0 0.0
    %1219 = vmatpush1.msra.mxu0 0.0
    %1220 = vmatprep.subr.mxu0 0.0
    %1221 = vmatpush1.msra.mxu0 0.0
    %1222 = vmatprep.subr.mxu0 0.0
    %1223 = vmatpush1.msra.mxu0 0.0
    %1224 = vmatprep.subr.mxu0 0.0
    %1225 = vmatpush1.msra.mxu0 0.0
    %1226 = vmatprep.subr.mxu0 0.0
    %1227 = vmatpush1.msra.mxu0 0.0
    %1228 = vmatprep.subr.mxu0 0.0
    %1229 = vmatpush1.msra.mxu0 0.0
    %1230 = vmatprep.subr.mxu0 0.0
    %1231 = vmatpush1.msra.mxu0 0.0
    %1232 = vmatprep.subr.mxu0 0.0
    %1233 = vmatpush1.msra.mxu0 0.0
    %1234 = vmatprep.subr.mxu0 0.0
    %1235 = vmatpush1.msra.mxu0 0.0
    %1236 = vmatprep.subr.mxu0 0.0
    %1237 = vmatpush1.msra.mxu0 0.0
    %1238 = vmatprep.subr.mxu0 0.0
    %1239 = vmatpush1.msra.mxu0 0.0
    %1240 = vmatprep.subr.mxu0 0.0
    %1241 = vmatpush1.msra.mxu0 0.0
    %1242 = vmatprep.subr.mxu0 0.0
    %1243 = vmatpush1.msra.mxu0 0.0
    %1244 = vmatprep.subr.mxu0 0.0
    %1245 = vmatpush1.msra.mxu0 0.0
    %1246 = vmatprep.subr.mxu0 0.0
    %1247 = vmatpush1.msra.mxu0 0.0
    %1248 = vmatprep.subr.mxu0 0.0
    %1249 = vmatpush1.msra.mxu0 0.0
    %1250 = vmatprep.subr.mxu0 0.0
    %1251 = vmatpush1.msra.mxu0 0.0
    %1252 = vmatprep.subr.mxu0 0.0
    %1253 = vmatpush1.msra.mxu0 0.0
    %1254 = vmatprep.subr.mxu0 0.0
    %1255 = vmatpush1.msra.mxu0 0.0
    %1256 = vmatprep.subr.mxu0 0.0
    %1257 = vmatpush1.msra.mxu0 0.0
    %1258 = vmatprep.subr.mxu0 0.0
    %1259 = vmatpush1.msra.mxu0 0.0
    %1260 = vmatprep.subr.mxu0 0.0
    %1261 = vmatpush1.msra.mxu0 0.0
    %1262 = vmatprep.mubr.f32.mxu0 0.0
    %1263 = vmatmul.mubr.f32.gmra.mrb[0].mxu0 %v1196
    %v1264 = vpop.f32.mrb[0].mxu0
    %v1265 = vadd.f32 0.0, %v1264
    %v1266 = vpop.f32.mrb[0].mxu0
    %1267 = vdwg.mxu0
    %v1269 = vrot.slane %v1265, 6
    %v1271 = vadd.f32 %v124, %v1269
    %v1272 = vxor.u32 %v1271, 2147483648
    %v1273 = vmul.f32 %v1272, 1.442695
    %v1274 = vpow.pop %v1273
    %v1275 = vadd.f32 %v1274, 1.0
    %v1276 = vrcp.pop %v1275
    %v1277 = vmul.f32 1.0, %v1276
    %v1278 = vtanh.pop %v1271
    %v1280 = vrot.slane %v1083, 6
    %v1282 = vmul.f32 %v1277, %v1280
    %1284 = vrot.lane.b32.xlu0 %v1278, 32
    %v1285 = vpop.permute.xlu0 %1284
    %v1287 = vmul.f32 %v1277, %v1285
    %1289 = vrot.lane.b32.xlu0 %v1287, 32
    %v1290 = vpop.permute.xlu0 %1289
    %v1292 = vadd.f32 %v1282, %v1290
    %v1293 = vtanh.pop %v1292
    %1295 = vrot.lane.b32.xlu0 %v1293, 32
    %v1296 = vpop.permute.xlu0 %1295
    %v1298 = vmul.f32 %v1277, %v1296
    %1300 = vrot.lane.b32.xlu0 %v1298, 64
    %v1301 = vpop.permute.xlu0 %1300
    %v1304 = vrot.slane %v1195, 6
    %1305 = vrot.lane.b32.xlu0 %v1304, 96
    %v1306 = vpop.permute.xlu0 %1305
    %v1308 = vsel %vm140, %v1301, %v1306
    %v1310 = vrot.slane %v1308, 2
    %v1311 = vsel %vm250, %v1310, 0
    %1313 = vmatprep.subr.mxu0 0.0
    %1314 = vmatpush1.msra.mxu0 %v131
    %1315 = vmatprep.subr.mxu0 0.0
    %1316 = vmatpush1.msra.mxu0 %v132
    %1317 = vmatprep.subr.mxu0 0.0
    %1318 = vmatpush1.msra.mxu0 %v133
    %1319 = vmatprep.subr.mxu0 0.0
    %1320 = vmatpush1.msra.mxu0 %v134
    %1321 = vmatprep.subr.mxu0 0.0
    %1322 = vmatpush1.msra.mxu0 %v135
    %1323 = vmatprep.subr.mxu0 0.0
    %1324 = vmatpush1.msra.mxu0 %v136
    %1325 = vmatprep.subr.mxu0 0.0
    %1326 = vmatpush1.msra.mxu0 %v137
    %1327 = vmatprep.subr.mxu0 0.0
    %1328 = vmatpush1.msra.mxu0 %v138
    %1329 = vmatprep.subr.mxu0 0.0
    %1330 = vmatpush1.msra.mxu0 0.0
    %1331 = vmatprep.subr.mxu0 0.0
    %1332 = vmatpush1.msra.mxu0 0.0
    %1333 = vmatprep.subr.mxu0 0.0
    %1334 = vmatpush1.msra.mxu0 0.0
    %1335 = vmatprep.subr.mxu0 0.0
    %1336 = vmatpush1.msra.mxu0 0.0
    %1337 = vmatprep.subr.mxu0 0.0
    %1338 = vmatpush1.msra.mxu0 0.0
    %1339 = vmatprep.subr.mxu0 0.0
    %1340 = vmatpush1.msra.mxu0 0.0
    %1341 = vmatprep.subr.mxu0 0.0
    %1342 = vmatpush1.msra.mxu0 0.0
    %1343 = vmatprep.subr.mxu0 0.0
    %1344 = vmatpush1.msra.mxu0 0.0
    %1345 = vmatprep.subr.mxu0 0.0
    %1346 = vmatpush1.msra.mxu0 0.0
    %1347 = vmatprep.subr.mxu0 0.0
    %1348 = vmatpush1.msra.mxu0 0.0
    %1349 = vmatprep.subr.mxu0 0.0
    %1350 = vmatpush1.msra.mxu0 0.0
    %1351 = vmatprep.subr.mxu0 0.0
    %1352 = vmatpush1.msra.mxu0 0.0
    %1353 = vmatprep.subr.mxu0 0.0
    %1354 = vmatpush1.msra.mxu0 0.0
    %1355 = vmatprep.subr.mxu0 0.0
    %1356 = vmatpush1.msra.mxu0 0.0
    %1357 = vmatprep.subr.mxu0 0.0
    %1358 = vmatpush1.msra.mxu0 0.0
    %1359 = vmatprep.subr.mxu0 0.0
    %1360 = vmatpush1.msra.mxu0 0.0
    %1361 = vmatprep.subr.mxu0 0.0
    %1362 = vmatpush1.msra.mxu0 0.0
    %1363 = vmatprep.subr.mxu0 0.0
    %1364 = vmatpush1.msra.mxu0 0.0
    %1365 = vmatprep.subr.mxu0 0.0
    %1366 = vmatpush1.msra.mxu0 0.0
    %1367 = vmatprep.subr.mxu0 0.0
    %1368 = vmatpush1.msra.mxu0 0.0
    %1369 = vmatprep.subr.mxu0 0.0
    %1370 = vmatpush1.msra.mxu0 0.0
    %1371 = vmatprep.subr.mxu0 0.0
    %1372 = vmatpush1.msra.mxu0 0.0
    %1373 = vmatprep.subr.mxu0 0.0
    %1374 = vmatpush1.msra.mxu0 0.0
    %1375 = vmatprep.subr.mxu0 0.0
    %1376 = vmatpush1.msra.mxu0 0.0
    %1377 = vmatprep.mubr.f32.mxu0 0.0
    %1378 = vmatmul.mubr.f32.gmra.mrb[0].mxu0 %v1311
    %v1379 = vpop.f32.mrb[0].mxu0
    %v1380 = vadd.f32 %v248, %v1379
    %v1381 = vpop.f32.mrb[0].mxu0
    %1382 = vdwg.mxu0
    %v1383 = vxor.u32 %v1380, 2147483648
    %v1384 = vmul.f32 %v1383, 1.442695
    %v1385 = vpow.pop %v1384
    %v1386 = vadd.f32 %v1385, 1.0
    %v1387 = vrcp.pop %v1386
    %v1388 = vmul.f32 1.0, %v1387
    %v1389 = vtanh.pop %v1380
    %v1390 = vmul.f32 %v1388, %v1189
    %1392 = vrot.lane.b32.xlu0 %v1389, 32
    %v1393 = vpop.permute.xlu0 %1392
    %v1395 = vmul.f32 %v1388, %v1393
    %1397 = vrot.lane.b32.xlu0 %v1395, 32
    %v1398 = vpop.permute.xlu0 %1397
    %v1400 = vadd.f32 %v1390, %v1398
    %v1401 = vtanh.pop %v1400
    %1403 = vrot.lane.b32.xlu0 %v1401, 32
    %v1404 = vpop.permute.xlu0 %1403
    %v1406 = vmul.f32 %v1388, %v1404
    %v1407 = vrot.slane %v1298, 2
    %1408 = vrot.lane.b32.xlu0 %v1407, 64
    %v1409 = vpop.permute.xlu0 %1408
    %v1410 = vsel %vm140, %v1409, 0
    %1412 = vmatprep.subr.mxu0 0.0
    %1413 = vmatpush1.msra.mxu0 %v127
    %1414 = vmatprep.subr.mxu0 0.0
    %1415 = vmatpush1.msra.mxu0 %v128
    %1416 = vmatprep.subr.mxu0 0.0
    %1417 = vmatpush1.msra.mxu0 %v129
    %1418 = vmatprep.subr.mxu0 0.0
    %1419 = vmatpush1.msra.mxu0 %v130
    %1420 = vmatprep.subr.mxu0 0.0
    %1421 = vmatpush1.msra.mxu0 0.0
    %1422 = vmatprep.subr.mxu0 0.0
    %1423 = vmatpush1.msra.mxu0 0.0
    %1424 = vmatprep.subr.mxu0 0.0
    %1425 = vmatpush1.msra.mxu0 0.0
    %1426 = vmatprep.subr.mxu0 0.0
    %1427 = vmatpush1.msra.mxu0 0.0
    %1428 = vmatprep.subr.mxu0 0.0
    %1429 = vmatpush1.msra.mxu0 0.0
    %1430 = vmatprep.subr.mxu0 0.0
    %1431 = vmatpush1.msra.mxu0 0.0
    %1432 = vmatprep.subr.mxu0 0.0
    %1433 = vmatpush1.msra.mxu0 0.0
    %1434 = vmatprep.subr.mxu0 0.0
    %1435 = vmatpush1.msra.mxu0 0.0
    %1436 = vmatprep.subr.mxu0 0.0
    %1437 = vmatpush1.msra.mxu0 0.0
    %1438 = vmatprep.subr.mxu0 0.0
    %1439 = vmatpush1.msra.mxu0 0.0
    %1440 = vmatprep.subr.mxu0 0.0
    %1441 = vmatpush1.msra.mxu0 0.0
    %1442 = vmatprep.subr.mxu0 0.0
    %1443 = vmatpush1.msra.mxu0 0.0
    %1444 = vmatprep.subr.mxu0 0.0
    %1445 = vmatpush1.msra.mxu0 0.0
    %1446 = vmatprep.subr.mxu0 0.0
    %1447 = vmatpush1.msra.mxu0 0.0
    %1448 = vmatprep.subr.mxu0 0.0
    %1449 = vmatpush1.msra.mxu0 0.0
    %1450 = vmatprep.subr.mxu0 0.0
    %1451 = vmatpush1.msra.mxu0 0.0
    %1452 = vmatprep.subr.mxu0 0.0
    %1453 = vmatpush1.msra.mxu0 0.0
    %1454 = vmatprep.subr.mxu0 0.0
    %1455 = vmatpush1.msra.mxu0 0.0
    %1456 = vmatprep.subr.mxu0 0.0
    %1457 = vmatpush1.msra.mxu0 0.0
    %1458 = vmatprep.subr.mxu0 0.0
    %1459 = vmatpush1.msra.mxu0 0.0
    %1460 = vmatprep.subr.mxu0 0.0
    %1461 = vmatpush1.msra.mxu0 0.0
    %1462 = vmatprep.subr.mxu0 0.0
    %1463 = vmatpush1.msra.mxu0 0.0
    %1464 = vmatprep.subr.mxu0 0.0
    %1465 = vmatpush1.msra.mxu0 0.0
    %1466 = vmatprep.subr.mxu0 0.0
    %1467 = vmatpush1.msra.mxu0 0.0
    %1468 = vmatprep.subr.mxu0 0.0
    %1469 = vmatpush1.msra.mxu0 0.0
    %1470 = vmatprep.subr.mxu0 0.0
    %1471 = vmatpush1.msra.mxu0 0.0
    %1472 = vmatprep.subr.mxu0 0.0
    %1473 = vmatpush1.msra.mxu0 0.0
    %1474 = vmatprep.subr.mxu0 0.0
    %1475 = vmatpush1.msra.mxu0 0.0
    %1476 = vmatprep.mubr.f32.mxu0 0.0
    %1477 = vmatmul.mubr.f32.gmra.mrb[0].mxu0 %v1410
    %v1478 = vpop.f32.mrb[0].mxu0
    %v1479 = vadd.f32 0.0, %v1478
    %v1480 = vpop.f32.mrb[0].mxu0
    %1481 = vdwg.mxu0
    %v1483 = vrot.slane %v1479, 4
    %v1485 = vadd.f32 %v124, %v1483
    %v1486 = vxor.u32 %v1485, 2147483648
    %v1487 = vmul.f32 %v1486, 1.442695
    %v1488 = vpow.pop %v1487
    %v1489 = vadd.f32 %v1488, 1.0
    %v1490 = vrcp.pop %v1489
    %v1491 = vmul.f32 1.0, %v1490
    %v1492 = vtanh.pop %v1485
    %v1494 = vrot.slane %v1292, 6
    %v1496 = vmul.f32 %v1491, %v1494
    %1498 = vrot.lane.b32.xlu0 %v1492, 32
    %v1499 = vpop.permute.xlu0 %1498
    %v1501 = vmul.f32 %v1491, %v1499
    %1503 = vrot.lane.b32.xlu0 %v1501, 32
    %v1504 = vpop.permute.xlu0 %1503
    %v1506 = vadd.f32 %v1496, %v1504
    %v1507 = vtanh.pop %v1506
    %1509 = vrot.lane.b32.xlu0 %v1507, 32
    %v1510 = vpop.permute.xlu0 %1509
    %v1512 = vmul.f32 %v1491, %v1510
    %1514 = vrot.lane.b32.xlu0 %v1512, 64
    %v1515 = vpop.permute.xlu0 %1514
    %v1518 = vrot.slane %v1406, 4
    %1519 = vrot.lane.b32.xlu0 %v1518, 96
    %v1520 = vpop.permute.xlu0 %1519
    %v1522 = vsel %vm140, %v1515, %v1520
    %v1524 = vrot.slane %v1522, 4
    %v1525 = vsel %vm250, %v1524, 0
    %1527 = vmatprep.subr.mxu0 0.0
    %1528 = vmatpush1.msra.mxu0 %v131
    %1529 = vmatprep.subr.mxu0 0.0
    %1530 = vmatpush1.msra.mxu0 %v132
    %1531 = vmatprep.subr.mxu0 0.0
    %1532 = vmatpush1.msra.mxu0 %v133
    %1533 = vmatprep.subr.mxu0 0.0
    %1534 = vmatpush1.msra.mxu0 %v134
    %1535 = vmatprep.subr.mxu0 0.0
    %1536 = vmatpush1.msra.mxu0 %v135
    %1537 = vmatprep.subr.mxu0 0.0
    %1538 = vmatpush1.msra.mxu0 %v136
    %1539 = vmatprep.subr.mxu0 0.0
    %1540 = vmatpush1.msra.mxu0 %v137
    %1541 = vmatprep.subr.mxu0 0.0
    %1542 = vmatpush1.msra.mxu0 %v138
    %1543 = vmatprep.subr.mxu0 0.0
    %1544 = vmatpush1.msra.mxu0 0.0
    %1545 = vmatprep.subr.mxu0 0.0
    %1546 = vmatpush1.msra.mxu0 0.0
    %1547 = vmatprep.subr.mxu0 0.0
    %1548 = vmatpush1.msra.mxu0 0.0
    %1549 = vmatprep.subr.mxu0 0.0
    %1550 = vmatpush1.msra.mxu0 0.0
    %1551 = vmatprep.subr.mxu0 0.0
    %1552 = vmatpush1.msra.mxu0 0.0
    %1553 = vmatprep.subr.mxu0 0.0
    %1554 = vmatpush1.msra.mxu0 0.0
    %1555 = vmatprep.subr.mxu0 0.0
    %1556 = vmatpush1.msra.mxu0 0.0
    %1557 = vmatprep.subr.mxu0 0.0
    %1558 = vmatpush1.msra.mxu0 0.0
    %1559 = vmatprep.subr.mxu0 0.0
    %1560 = vmatpush1.msra.mxu0 0.0
    %1561 = vmatprep.subr.mxu0 0.0
    %1562 = vmatpush1.msra.mxu0 0.0
    %1563 = vmatprep.subr.mxu0 0.0
    %1564 = vmatpush1.msra.mxu0 0.0
    %1565 = vmatprep.subr.mxu0 0.0
    %1566 = vmatpush1.msra.mxu0 0.0
    %1567 = vmatprep.subr.mxu0 0.0
    %1568 = vmatpush1.msra.mxu0 0.0
    %1569 = vmatprep.subr.mxu0 0.0
    %1570 = vmatpush1.msra.mxu0 0.0
    %1571 = vmatprep.subr.mxu0 0.0
    %1572 = vmatpush1.msra.mxu0 0.0
    %1573 = vmatprep.subr.mxu0 0.0
    %1574 = vmatpush1.msra.mxu0 0.0
    %1575 = vmatprep.subr.mxu0 0.0
    %1576 = vmatpush1.msra.mxu0 0.0
    %1577 = vmatprep.subr.mxu0 0.0
    %1578 = vmatpush1.msra.mxu0 0.0
    %1579 = vmatprep.subr.mxu0 0.0
    %1580 = vmatpush1.msra.mxu0 0.0
    %1581 = vmatprep.subr.mxu0 0.0
    %1582 = vmatpush1.msra.mxu0 0.0
    %1583 = vmatprep.subr.mxu0 0.0
    %1584 = vmatpush1.msra.mxu0 0.0
    %1585 = vmatprep.subr.mxu0 0.0
    %1586 = vmatpush1.msra.mxu0 0.0
    %1587 = vmatprep.subr.mxu0 0.0
    %1588 = vmatpush1.msra.mxu0 0.0
    %1589 = vmatprep.subr.mxu0 0.0
    %1590 = vmatpush1.msra.mxu0 0.0
    %1591 = vmatprep.mubr.f32.mxu0 0.0
    %1592 = vmatmul.mubr.f32.gmra.mrb[0].mxu0 %v1525
    %v1593 = vpop.f32.mrb[0].mxu0
    %v1594 = vadd.f32 %v248, %v1593
    %v1595 = vpop.f32.mrb[0].mxu0
    %1596 = vdwg.mxu0
    %v1597 = vxor.u32 %v1594, 2147483648
    %v1598 = vmul.f32 %v1597, 1.442695
    %v1599 = vpow.pop %v1598
    %v1600 = vadd.f32 %v1599, 1.0
    %v1601 = vrcp.pop %v1600
    %v1602 = vmul.f32 1.0, %v1601
    %v1603 = vtanh.pop %v1594
    %v1604 = vmul.f32 %v1602, %v1400
    %1606 = vrot.lane.b32.xlu0 %v1603, 32
    %v1607 = vpop.permute.xlu0 %1606
    %v1609 = vmul.f32 %v1602, %v1607
    %1611 = vrot.lane.b32.xlu0 %v1609, 32
    %v1612 = vpop.permute.xlu0 %1611
    %v1614 = vadd.f32 %v1604, %v1612
    %v1615 = vtanh.pop %v1614
    %1617 = vrot.lane.b32.xlu0 %v1615, 32
    %v1618 = vpop.permute.xlu0 %1617
    %v1620 = vmul.f32 %v1602, %v1618
    %v1621 = vrot.slane %v1512, 4
    %1622 = vrot.lane.b32.xlu0 %v1621, 64
    %v1623 = vpop.permute.xlu0 %1622
    %v1624 = vsel %vm140, %v1623, 0
    %1626 = vmatprep.subr.mxu0 0.0
    %1627 = vmatpush1.msra.mxu0 %v127
    %1628 = vmatprep.subr.mxu0 0.0
    %1629 = vmatpush1.msra.mxu0 %v128
    %1630 = vmatprep.subr.mxu0 0.0
    %1631 = vmatpush1.msra.mxu0 %v129
    %1632 = vmatprep.subr.mxu0 0.0
    %1633 = vmatpush1.msra.mxu0 %v130
    %1634 = vmatprep.subr.mxu0 0.0
    %1635 = vmatpush1.msra.mxu0 0.0
    %1636 = vmatprep.subr.mxu0 0.0
    %1637 = vmatpush1.msra.mxu0 0.0
    %1638 = vmatprep.subr.mxu0 0.0
    %1639 = vmatpush1.msra.mxu0 0.0
    %1640 = vmatprep.subr.mxu0 0.0
    %1641 = vmatpush1.msra.mxu0 0.0
    %1642 = vmatprep.subr.mxu0 0.0
    %1643 = vmatpush1.msra.mxu0 0.0
    %1644 = vmatprep.subr.mxu0 0.0
    %1645 = vmatpush1.msra.mxu0 0.0
    %1646 = vmatprep.subr.mxu0 0.0
    %1647 = vmatpush1.msra.mxu0 0.0
    %1648 = vmatprep.subr.mxu0 0.0
    %1649 = vmatpush1.msra.mxu0 0.0
    %1650 = vmatprep.subr.mxu0 0.0
    %1651 = vmatpush1.msra.mxu0 0.0
    %1652 = vmatprep.subr.mxu0 0.0
    %1653 = vmatpush1.msra.mxu0 0.0
    %1654 = vmatprep.subr.mxu0 0.0
    %1655 = vmatpush1.msra.mxu0 0.0
    %1656 = vmatprep.subr.mxu0 0.0
    %1657 = vmatpush1.msra.mxu0 0.0
    %1658 = vmatprep.subr.mxu0 0.0
    %1659 = vmatpush1.msra.mxu0 0.0
    %1660 = vmatprep.subr.mxu0 0.0
    %1661 = vmatpush1.msra.mxu0 0.0
    %1662 = vmatprep.subr.mxu0 0.0
    %1663 = vmatpush1.msra.mxu0 0.0
    %1664 = vmatprep.subr.mxu0 0.0
    %1665 = vmatpush1.msra.mxu0 0.0
    %1666 = vmatprep.subr.mxu0 0.0
    %1667 = vmatpush1.msra.mxu0 0.0
    %1668 = vmatprep.subr.mxu0 0.0
    %1669 = vmatpush1.msra.mxu0 0.0
    %1670 = vmatprep.subr.mxu0 0.0
    %1671 = vmatpush1.msra.mxu0 0.0
    %1672 = vmatprep.subr.mxu0 0.0
    %1673 = vmatpush1.msra.mxu0 0.0
    %1674 = vmatprep.subr.mxu0 0.0
    %1675 = vmatpush1.msra.mxu0 0.0
    %1676 = vmatprep.subr.mxu0 0.0
    %1677 = vmatpush1.msra.mxu0 0.0
    %1678 = vmatprep.subr.mxu0 0.0
    %1679 = vmatpush1.msra.mxu0 0.0
    %1680 = vmatprep.subr.mxu0 0.0
    %1681 = vmatpush1.msra.mxu0 0.0
    %1682 = vmatprep.subr.mxu0 0.0
    %1683 = vmatpush1.msra.mxu0 0.0
    %1684 = vmatprep.subr.mxu0 0.0
    %1685 = vmatpush1.msra.mxu0 0.0
    %1686 = vmatprep.subr.mxu0 0.0
    %1687 = vmatpush1.msra.mxu0 0.0
    %1688 = vmatprep.subr.mxu0 0.0
    %1689 = vmatpush1.msra.mxu0 0.0
    %1690 = vmatprep.mubr.f32.mxu0 0.0
    %1691 = vmatmul.mubr.f32.gmra.mrb[0].mxu0 %v1624
    %v1692 = vpop.f32.mrb[0].mxu0
    %v1693 = vadd.f32 0.0, %v1692
    %v1694 = vpop.f32.mrb[0].mxu0
    %1695 = vdwg.mxu0
    %v1697 = vrot.slane %v1693, 2
    %v1699 = vadd.f32 %v124, %v1697
    %v1700 = vxor.u32 %v1699, 2147483648
    %v1701 = vmul.f32 %v1700, 1.442695
    %v1702 = vpow.pop %v1701
    %v1703 = vadd.f32 %v1702, 1.0
    %v1704 = vrcp.pop %v1703
    %v1705 = vmul.f32 1.0, %v1704
    %v1706 = vtanh.pop %v1699
    %v1708 = vrot.slane %v1506, 6
    %v1710 = vmul.f32 %v1705, %v1708
    %1712 = vrot.lane.b32.xlu0 %v1706, 32
    %v1713 = vpop.permute.xlu0 %1712
    %v1715 = vmul.f32 %v1705, %v1713
    %1717 = vrot.lane.b32.xlu0 %v1715, 32
    %v1718 = vpop.permute.xlu0 %1717
    %v1720 = vadd.f32 %v1710, %v1718
    %v1721 = vtanh.pop %v1720
    %1723 = vrot.lane.b32.xlu0 %v1721, 32
    %v1724 = vpop.permute.xlu0 %1723
    %v1726 = vmul.f32 %v1705, %v1724
    %1728 = vrot.lane.b32.xlu0 %v1726, 64
    %v1729 = vpop.permute.xlu0 %1728
    %v1732 = vrot.slane %v1620, 2
    %1733 = vrot.lane.b32.xlu0 %v1732, 96
    %v1734 = vpop.permute.xlu0 %1733
    %v1736 = vsel %vm140, %v1729, %v1734
    %v1738 = vrot.slane %v1736, 6
    %v1739 = vsel %vm250, %v1738, 0
    %1741 = vmatprep.subr.mxu0 0.0
    %1742 = vmatpush1.msra.mxu0 %v131
    %1743 = vmatprep.subr.mxu0 0.0
    %1744 = vmatpush1.msra.mxu0 %v132
    %1745 = vmatprep.subr.mxu0 0.0
    %1746 = vmatpush1.msra.mxu0 %v133
    %1747 = vmatprep.subr.mxu0 0.0
    %1748 = vmatpush1.msra.mxu0 %v134
    %1749 = vmatprep.subr.mxu0 0.0
    %1750 = vmatpush1.msra.mxu0 %v135
    %1751 = vmatprep.subr.mxu0 0.0
    %1752 = vmatpush1.msra.mxu0 %v136
    %1753 = vmatprep.subr.mxu0 0.0
    %1754 = vmatpush1.msra.mxu0 %v137
    %1755 = vmatprep.subr.mxu0 0.0
    %1756 = vmatpush1.msra.mxu0 %v138
    %1757 = vmatprep.subr.mxu0 0.0
    %1758 = vmatpush1.msra.mxu0 0.0
    %1759 = vmatprep.subr.mxu0 0.0
    %1760 = vmatpush1.msra.mxu0 0.0
    %1761 = vmatprep.subr.mxu0 0.0
    %1762 = vmatpush1.msra.mxu0 0.0
    %1763 = vmatprep.subr.mxu0 0.0
    %1764 = vmatpush1.msra.mxu0 0.0
    %1765 = vmatprep.subr.mxu0 0.0
    %1766 = vmatpush1.msra.mxu0 0.0
    %1767 = vmatprep.subr.mxu0 0.0
    %1768 = vmatpush1.msra.mxu0 0.0
    %1769 = vmatprep.subr.mxu0 0.0
    %1770 = vmatpush1.msra.mxu0 0.0
    %1771 = vmatprep.subr.mxu0 0.0
    %1772 = vmatpush1.msra.mxu0 0.0
    %1773 = vmatprep.subr.mxu0 0.0
    %1774 = vmatpush1.msra.mxu0 0.0
    %1775 = vmatprep.subr.mxu0 0.0
    %1776 = vmatpush1.msra.mxu0 0.0
    %1777 = vmatprep.subr.mxu0 0.0
    %1778 = vmatpush1.msra.mxu0 0.0
    %1779 = vmatprep.subr.mxu0 0.0
    %1780 = vmatpush1.msra.mxu0 0.0
    %1781 = vmatprep.subr.mxu0 0.0
    %1782 = vmatpush1.msra.mxu0 0.0
    %1783 = vmatprep.subr.mxu0 0.0
    %1784 = vmatpush1.msra.mxu0 0.0
    %1785 = vmatprep.subr.mxu0 0.0
    %1786 = vmatpush1.msra.mxu0 0.0
    %1787 = vmatprep.subr.mxu0 0.0
    %1788 = vmatpush1.msra.mxu0 0.0
    %1789 = vmatprep.subr.mxu0 0.0
    %1790 = vmatpush1.msra.mxu0 0.0
    %1791 = vmatprep.subr.mxu0 0.0
    %1792 = vmatpush1.msra.mxu0 0.0
    %1793 = vmatprep.subr.mxu0 0.0
    %1794 = vmatpush1.msra.mxu0 0.0
    %1795 = vmatprep.subr.mxu0 0.0
    %1796 = vmatpush1.msra.mxu0 0.0
    %1797 = vmatprep.subr.mxu0 0.0
    %1798 = vmatpush1.msra.mxu0 0.0
    %1799 = vmatprep.subr.mxu0 0.0
    %1800 = vmatpush1.msra.mxu0 0.0
    %1801 = vmatprep.subr.mxu0 0.0
    %1802 = vmatpush1.msra.mxu0 0.0
    %1803 = vmatprep.subr.mxu0 0.0
    %1804 = vmatpush1.msra.mxu0 0.0
    %1805 = vmatprep.mubr.f32.mxu0 0.0
    %1806 = vmatmul.mubr.f32.gmra.mrb[0].mxu0 %v1739
    %v1807 = vpop.f32.mrb[0].mxu0
    %v1808 = vadd.f32 %v248, %v1807
    %v1809 = vpop.f32.mrb[0].mxu0
    %1810 = vdwg.mxu0
    %v1811 = vxor.u32 %v1808, 2147483648
    %v1812 = vmul.f32 %v1811, 1.442695
    %v1813 = vpow.pop %v1812
    %v1814 = vadd.f32 %v1813, 1.0
    %v1815 = vrcp.pop %v1814
    %v1816 = vmul.f32 1.0, %v1815
    %v1817 = vtanh.pop %v1808
    %v1818 = vmul.f32 %v1816, %v1614
    %1820 = vrot.lane.b32.xlu0 %v1817, 32
    %v1821 = vpop.permute.xlu0 %1820
    %v1823 = vmul.f32 %v1816, %v1821
    %1825 = vrot.lane.b32.xlu0 %v1823, 32
    %v1826 = vpop.permute.xlu0 %1825
    %v1828 = vadd.f32 %v1818, %v1826
    %v1829 = vtanh.pop %v1828
    %1831 = vrot.lane.b32.xlu0 %v1829, 32
    %v1832 = vpop.permute.xlu0 %1831
    %v1834 = vmul.f32 %v1816, %v1832
    %v1835 = vrot.slane %v558, 6
    %v1837 = vrot.slane %v772, 4
    %v1839 = vrot.slane %v986, 2
    %v1841 = vrot.slane %v1406, 6
    %v1843 = vrot.slane %v1620, 4
    %v1846 = vrot.slane %v1834, 2
    %vm1848 = vcmask 1041408
    %v1849 = vsel %vm1848, %v347, %v1835
    %vm1850 = vcmask 1043456
    %v1851 = vsel %vm1850, %v1849, %v1837
    %vm1852 = vcmask 1045504
    %v1853 = vsel %vm1852, %v1851, %v1839
    %v1854 = vsel %vm1848, %v1195, %v1841
    %v1855 = vsel %vm1850, %v1854, %v1843
    %v1856 = vsel %vm1852, %v1855, %v1846
    %v1857 = vld [vmem:[%s6] sm:$0xff]
    %v1858 = vld [vmem:[%s6 + $0x8] sm:$0xff]
    %v1859 = vld [vmem:[%s6 + $0x10] sm:$0xff]
    %v1860 = vld [vmem:[%s6 + $0x18] sm:$0xff]
    %v1861 = vld [vmem:[%s6 + $0x20] sm:$0xff]
    %v1862 = vld [vmem:[%s6 + $0x28] sm:$0xff]
    %v1863 = vld [vmem:[%s6 + $0x30] sm:$0xff]
    %v1864 = vld [vmem:[%s6 + $0x38] sm:$0xff]
    %v1865 = vld [vmem:[%s7] sm:$0x3]
    %v1867 = vlaneseq
    %v1868 = vshrl.u32 %v1867, 7
    %v1869 = vsub.s32 0, %v1868
    %v1870 = vrot.slane %v1865, %v1869
    %v1871 = vlaneseq
    %v1872 = vshrl.u32 %v1871, 7
    %v1873 = vsub.s32 1, %v1872
    %v1874 = vrot.slane %v1865, %v1873
    %1879 = vrot.lane.b32.xlu0 %v1853, 64
    %v1880 = vpop.permute.xlu0 %1879
    %1881 = vrot.lane.b32.xlu0 %v1856, 64
    %v1882 = vpop.permute.xlu0 %1881
    %v1883 = vsel %vm140, %v1880, 0
    %v1885 = vsel %vm140, %v1882, 0
    %1887 = vmatprep.subr.mxu0 %v1858
    %1888 = vmatpush1.msra.mxu0 %v1857
    %1889 = vmatprep.subr.mxu0 %v1860
    %1890 = vmatpush1.msra.mxu0 %v1859
    %1891 = vmatprep.subr.mxu0 %v1862
    %1892 = vmatpush1.msra.mxu0 %v1861
    %1893 = vmatprep.subr.mxu0 %v1864
    %1894 = vmatpush1.msra.mxu0 %v1863
    %1895 = vmatprep.subr.mxu0 0.0
    %1896 = vmatpush1.msra.mxu0 0.0
    %1897 = vmatprep.subr.mxu0 0.0
    %1898 = vmatpush1.msra.mxu0 0.0
    %1899 = vmatprep.subr.mxu0 0.0
    %1900 = vmatpush1.msra.mxu0 0.0
    %1901 = vmatprep.subr.mxu0 0.0
    %1902 = vmatpush1.msra.mxu0 0.0
    %1903 = vmatprep.subr.mxu0 0.0
    %1904 = vmatpush1.msra.mxu0 0.0
    %1905 = vmatprep.subr.mxu0 0.0
    %1906 = vmatpush1.msra.mxu0 0.0
    %1907 = vmatprep.subr.mxu0 0.0
    %1908 = vmatpush1.msra.mxu0 0.0
    %1909 = vmatprep.subr.mxu0 0.0
    %1910 = vmatpush1.msra.mxu0 0.0
    %1911 = vmatprep.subr.mxu0 0.0
    %1912 = vmatpush1.msra.mxu0 0.0
    %1913 = vmatprep.subr.mxu0 0.0
    %1914 = vmatpush1.msra.mxu0 0.0
    %1915 = vmatprep.subr.mxu0 0.0
    %1916 = vmatpush1.msra.mxu0 0.0
    %1917 = vmatprep.subr.mxu0 0.0
    %1918 = vmatpush1.msra.mxu0 0.0
    %1919 = vmatprep.subr.mxu0 0.0
    %1920 = vmatpush1.msra.mxu0 0.0
    %1921 = vmatprep.subr.mxu0 0.0
    %1922 = vmatpush1.msra.mxu0 0.0
    %1923 = vmatprep.subr.mxu0 0.0
    %1924 = vmatpush1.msra.mxu0 0.0
    %1925 = vmatprep.subr.mxu0 0.0
    %1926 = vmatpush1.msra.mxu0 0.0
    %1927 = vmatprep.subr.mxu0 0.0
    %1928 = vmatpush1.msra.mxu0 0.0
    %1929 = vmatprep.subr.mxu0 0.0
    %1930 = vmatpush1.msra.mxu0 0.0
    %1931 = vmatprep.subr.mxu0 0.0
    %1932 = vmatpush1.msra.mxu0 0.0
    %1933 = vmatprep.subr.mxu0 0.0
    %1934 = vmatpush1.msra.mxu0 0.0
    %1935 = vmatprep.subr.mxu0 0.0
    %1936 = vmatpush1.msra.mxu0 0.0
    %1937 = vmatprep.subr.mxu0 0.0
    %1938 = vmatpush1.msra.mxu0 0.0
    %1939 = vmatprep.subr.mxu0 0.0
    %1940 = vmatpush1.msra.mxu0 0.0
    %1941 = vmatprep.subr.mxu0 0.0
    %1942 = vmatpush1.msra.mxu0 0.0
    %1943 = vmatprep.subr.mxu0 0.0
    %1944 = vmatpush1.msra.mxu0 0.0
    %1945 = vmatprep.subr.mxu0 0.0
    %1946 = vmatpush1.msra.mxu0 0.0
    %1947 = vmatprep.subr.mxu0 0.0
    %1948 = vmatpush1.msra.mxu0 0.0
    %1949 = vmatprep.subr.mxu0 0.0
    %1950 = vmatpush1.msra.mxu0 0.0
    %1951 = vmatprep.mubr.f32.mxu0 0.0
    %1952 = vmatmul.mubr.f32.gmra.mrb[0].mxu0 %v1883
    %v1953 = vpop.f32.mrb[0].mxu0
    %v1954 = vadd.f32 %v1870, %v1953
    %v1955 = vpop.f32.mrb[0].mxu0
    %v1956 = vadd.f32 %v1874, %v1955
    %1957 = vmatprep.mubr.f32.mxu0 0.0
    %1958 = vmatmul.mubr.f32.gmra.mrb[0].mxu0 %v1885
    %v1959 = vpop.f32.mrb[0].mxu0
    %v1960 = vadd.f32 %v1870, %v1959
    %v1961 = vpop.f32.mrb[0].mxu0
    %v1962 = vadd.f32 %v1874, %v1961
    %1963 = vdwg.mxu0
    %1964 = vst [vmem:[%s8] sm:$0xff] %v1954
    %vm1965 = vcmask 31744
    %1966 = vst.msk [vmem:[%s8 + $0x8] sm:$0xff] %vm1965, %v1956
    %1967 = vst [vmem:[%s8 + $0x10] sm:$0xff] %v1960
    %1968 = vst.msk [vmem:[%s8 + $0x18] sm:$0xff] %vm1965, %v1962
    %vm1969 = vcmask 261126
    %1970 = vst.msk [vmem:[#allocation2 - $0x6] sm:$0xc0] %vm1969, %v1729
    %1972 = vrot.lane.b32.xlu0 %v1720, 96
    %v1973 = vpop.permute.xlu0 %1972
    %1975 = vst.msk [vmem:[#allocation4 - $0x6] sm:$0xc0] %vm1969, %v1973
    %1976 = vrot.lane.b32.xlu0 %v1834, 64
    %v1977 = vpop.permute.xlu0 %1976
    %s1979 = scalar_lea.vmem [#allocation2], 2
    %vm1980 = vcmask 254976
    %1981 = vst.msk [vmem:[%s1979] sm:$0x3] %vm1980, %v1977
    %1983 = vrot.lane.b32.xlu0 %v1828, 96
    %v1984 = vpop.permute.xlu0 %1983
    %s1986 = scalar_lea.vmem [#allocation4], 2
    %1987 = vst.msk [vmem:[%s1986] sm:$0x3] %vm1980, %v1984
    // Predicated region
    $region34: #{mdnrnn_forward.1} parent=1 // pred_check
      _
    $region35: #{mdnrnn_forward.1} parent=1 // pred_check_branch
      %1989 = sbr.rel (0) target = $region37
    $region36: #{mdnrnn_forward.1} parent=1 // pred_region
      _
    $region37: #{mdnrnn_forward.1} parent=1 // pred_fallthru
      _
    // Predicated region
    $region38: #{mdnrnn_forward.1} parent=1 // pred_check
      _
    $region39: #{mdnrnn_forward.1} parent=1 // pred_check_branch
      %1991 = sbr.rel (0) target = $region41
    $region40: #{mdnrnn_forward.1} parent=1 // pred_region
      %s1993 = ssub.s32 64, 64
      %1994 = vsyncadd [#allocation3], %s1993
      %s1995 = sshll.u32 [#allocation2], 4
      %s1996 = int_to_ptr.vmem [resolvable:$true] %s1995
      %2001 = dma.vmem_to_hbm [thread:$0]  %s1996, 64, %s9, [#allocation3], 32, 32, 2
    $region41: #{mdnrnn_forward.1} parent=1 // pred_fallthru
      _
    // Predicated region
    $region42: #{mdnrnn_forward.1} parent=1 // pred_check
      _
    $region43: #{mdnrnn_forward.1} parent=1 // pred_check_branch
      %2003 = sbr.rel (0) target = $region45
    $region44: #{mdnrnn_forward.1} parent=1 // pred_region
      %s2005 = ssub.s32 64, 64
      %2006 = vsyncadd [#allocation5], %s2005
      %s2007 = sshll.u32 [#allocation4], 4
      %s2008 = int_to_ptr.vmem [resolvable:$true] %s2007
      %2013 = dma.vmem_to_hbm [thread:$0]  %s2008, 64, %s10, [#allocation5], 32, 32, 2
    $region45: #{mdnrnn_forward.1} parent=1 // pred_fallthru
      _
    // Predicated region
    $region46: #{mdnrnn_forward.1} parent=1 // pred_check
      _
    $region47: #{mdnrnn_forward.1} parent=1 // pred_check_branch
      %2015 = sbr.rel (0) target = $region49
    $region48: #{mdnrnn_forward.1} parent=1 // pred_region
      _
    $region49: #{mdnrnn_forward.1} parent=1 // pred_fallthru
      _
    // Predicated region
    $region50: #{mdnrnn_forward.1} parent=1 // pred_check
      _
    $region51: #{mdnrnn_forward.1} parent=1 // pred_check_branch
      %2017 = sbr.rel (0) target = $region53
    $region52: #{mdnrnn_forward.1} parent=1 // pred_region
      %2018 = dma.done [#allocation3], 64
    $region53: #{mdnrnn_forward.1} parent=1 // pred_fallthru
      _
    // Predicated region
    $region54: #{mdnrnn_forward.1} parent=1 // pred_check
      _
    $region55: #{mdnrnn_forward.1} parent=1 // pred_check_branch
      %2020 = sbr.rel (0) target = $region57
    $region56: #{mdnrnn_forward.1} parent=1 // pred_region
      %2021 = dma.done [#allocation5], 64
    $region57: #{mdnrnn_forward.1} parent=1 // pred_fallthru
      _
    %2022 = vsyncpa [#allocation3], 1
    %2023 = vsyncpa [#allocation5], 1

</llo_original>
